<compile_context>
chip_gen: v7x
topology: tpu7x:2x2x1
jax: 0.10.0
libtpu: 0.0.40
codegen_flags: <defaults>
</compile_context>

<pallas_src>
import jax
import jax.numpy as jnp
from jax import lax
from jax.experimental import pallas as pl
from jax.experimental.pallas import tpu as pltpu


def _round_up(x, m):
    return (x + m - 1) // m * m


def _pick_chunk_rows(H, WCP, target_bytes=64 * 1024):
    """Largest divisor of H whose f32 conv-output chunk (rc, WCP) stays <= target_bytes."""
    rc_max = max(1, min(H, target_bytes // (WCP * 4)))
    rc = 1
    for d in range(1, rc_max + 1):
        if H % d == 0:
            rc = d
    return rc


def _make_kernel(H, rc, inv_hw):
    """rc divides H; all shapes below are compile-time constants."""
    nchunks = H // rc

    def kernel(x_ref, wconv_ref, bconv_ref, wvis_ref, bvis_ref,
               wdet_ref, bdet_ref, whv_ref, whd_ref, bhead_ref, out_ref):
        RWP = x_ref.shape[1]          # lane-padded (W+2)*C
        WCP = wconv_ref.shape[1]      # lane-padded W*CMID

        def chunk_update(slab, vis_acc, det_acc):
            # slab: (rc+2, RWP) padded-image rows [s, s+rc+2); lane layout = (w, c) flattened.
            x0 = slab[0:rc, :]
            x1 = slab[1:rc + 1, :]        # center rows == raw image rows (reused for det)
            x2 = slab[2:rc + 2, :]
            # One fused matmul: K = 3*RWP over the block-Toeplitz conv weight.
            xcat = jnp.concatenate([x0, x1, x2], axis=-1)          # (rc, 3*RWP)
            pre = jnp.dot(xcat, wconv_ref[...],
                          preferred_element_type=jnp.float32) + bconv_ref[...]
            conv = jnp.maximum(pre, 0.0)                            # (rc, WCP), ReLU
            vis_acc = vis_acc + jnp.sum(conv, axis=0, keepdims=True)
            det_acc = det_acc + jnp.sum(x1.astype(jnp.float32), axis=0, keepdims=True)
            return vis_acc, det_acc

        vis_acc = jnp.zeros((1, WCP), jnp.float32)   # GAP partial over rows & W (folded in lanes)
        det_acc = jnp.zeros((1, RWP), jnp.float32)

        if nchunks <= 8:
            # Short static loop: unrolled, static slices.
            for ci in range(nchunks):
                slab = x_ref[ci * rc:ci * rc + rc + 2, :]
                vis_acc, det_acc = chunk_update(slab, vis_acc, det_acc)
        else:
            def body(ci, carry):
                s = ci * rc
                if rc % 8 == 0:
                    s = pl.multiple_of(s, 8)
                slab = x_ref[pl.ds(s, rc + 2), :]
                return chunk_update(slab, *carry)
            vis_acc, det_acc = lax.fori_loop(0, nchunks, body, (vis_acc, det_acc))

        # ---- finalize: GAP -> fc heads -> split head matmul (== concat + Linear(idim, odim)).
        pooled_vis = vis_acc * inv_hw                                # (1, WCP)
        vis_out = jnp.dot(pooled_vis, wvis_ref[...],
                          preferred_element_type=jnp.float32) + bvis_ref[...]
        pooled_det = det_acc * inv_hw                                # (1, RWP)
        det_out = jnp.dot(pooled_det, wdet_ref[...],
                          preferred_element_type=jnp.float32) + bdet_ref[...]
        out = (jnp.dot(vis_out, whv_ref[...], preferred_element_type=jnp.float32)
               + jnp.dot(det_out, whd_ref[...], preferred_element_type=jnp.float32)
               + bhead_ref[...])                                     # (1, ODIMP)
        out_ref[...] = out.reshape(out_ref.shape)

    return kernel


def joint_vis_det_forward(img, params, stream_dtype=jnp.float32):
    """img: NCHW float32, same convention as the PyTorch module.

    stream_dtype=jnp.bfloat16 streams the image + conv weight in bf16 (f32 accumulation),
    halving HBM traffic on v5e/v6e/v7x.
    """
    B, C, H, W = img.shape
    wconv, bconv, wvis, bvis, wdet, bdet, whead, bhead = params
    CMID = wconv.shape[2]
    VIS = wvis.shape[1]
    DET = wdet.shape[1]
    ODIM = whead.shape[1]

    RW = (W + 2) * C
    RWP = _round_up(RW, 128)         # lane-padded padded-image row width
    WC = W * CMID
    WCP = _round_up(WC, 128)         # lane-padded conv output width (W folded into lanes)
    ODIMP = _round_up(ODIM, 128)

    # ---- dense, lane-major activation stream: (B, H+2, RWP), streamed exactly once.
    x = jnp.transpose(img, (0, 2, 3, 1))                        # (B, H, W, C)
    xp = jnp.pad(x, ((0, 0), (1, 1), (1, 1), (0, 0)))           # (B, H+2, W+2, C)
    xd = jnp.pad(xp.reshape(B, H + 2, RW), ((0, 0), (0, 0), (0, RWP - RW)))
    xd = xd.astype(stream_dtype)

    # ---- block-Toeplitz conv weight: conv3x3 "same" == sum_di x_rows(di) @ BigW_di,
    #      stacked along K so the kernel issues ONE deep-K matmul per row chunk.
    eye_shift = [jnp.zeros((W + 2, W), jnp.float32)
                 .at[jnp.arange(W) + dj, jnp.arange(W)].set(1.0) for dj in range(3)]
    big = []
    for di in range(3):
        Wd = sum(jnp.kron(eye_shift[dj], wconv[3 * di + dj]) for dj in range(3))  # (RW, WC)
        big.append(jnp.pad(Wd, ((0, RWP - RW), (0, WCP - WC))))
    wconv_big = jnp.concatenate(big, axis=0).astype(stream_dtype)                 # (3*RWP, WCP)

    # Biases / fc weights with W (and the halo/pad lanes) folded in; padded lanes are zero.
    bconv_flat = jnp.pad(jnp.tile(bconv, (1, W)), ((0, 0), (0, WCP - WC)))        # (1, WCP)
    wvis_rep = jnp.pad(jnp.tile(wvis, (W, 1)), ((0, WCP - WC), (0, 0)))           # (WCP, VIS)
    wdet_rep = jnp.zeros((RWP, DET), jnp.float32).at[C:C + W * C, :].set(
        jnp.tile(wdet, (W, 1)))                                                   # (RWP, DET)
    whv = jnp.pad(whead[:VIS, :], ((0, 0), (0, ODIMP - ODIM)))                    # (VIS, ODIMP)
    whd = jnp.pad(whead[VIS:VIS + DET, :], ((0, 0), (0, ODIMP - ODIM)))           # (DET, ODIMP)
    bhead_p = jnp.pad(bhead, ((0, 0), (0, ODIMP - ODIM)))                         # (1, ODIMP)

    rc = _pick_chunk_rows(H, WCP)
    kernel = _make_kernel(H, rc, 1.0 / float(H * W))

    # Whole padded image per grid step (tile_h == H): one block, auto double-buffered
    # across the batch axis; lane dims are full/128-multiples => dense DMA + vst.
    x_spec = pl.BlockSpec((None, H + 2, RWP), lambda b: (b, 0, 0))

    consts = (wconv_big, bconv_flat, wvis_rep, bvis, wdet_rep, bdet, whv, whd, bhead_p)

    def run(single_buffer_weights):
        def resident(a):
            nd = a.ndim
            if single_buffer_weights:
                # Constant index map -> no need for double buffers (VMEM headroom on v7x).
                return pl.BlockSpec(a.shape, lambda b, _nd=nd: (0,) * _nd,
                                    pipeline_mode=pl.Buffered(1))
            return pl.BlockSpec(a.shape, lambda b, _nd=nd: (0,) * _nd)

        out_p = pl.pallas_call(
            kernel,
            out_shape=jax.ShapeDtypeStruct((B, 1, ODIMP), jnp.float32),
            grid=(B,),
            in_specs=[x_spec] + [resident(a) for a in consts],
            out_specs=pl.BlockSpec((1, 1, ODIMP), lambda b: (b, 0, 0)),
            compiler_params=pltpu.CompilerParams(
                # Batch axis shards across the two TensorCores on v7x.
                dimension_semantics=("parallel",),
                # Toy footprint is ~1 MiB; keep well under v7x's 64 MiB physical VMEM.
                vmem_limit_bytes=32 * 1024 * 1024),
        )(xd, *consts)
        return jax.block_until_ready(out_p)

    try:
        out_p = run(True)
    except Exception:
        # Fallback if this Pallas build rejects pipeline_mode=pl.Buffered(1).
        out_p = run(False)

    return out_p.reshape(B, ODIMP)[:, :ODIM]


def joint_vis_det_ref(img, params):
    """Pure-JAX reference of the same forward semantics."""
    wconv, bconv, wvis, bvis, wdet, bdet, whead, bhead = params
    x = jnp.transpose(img, (0, 2, 3, 1))
    B, H, W, C = x.shape
    CMID = wconv.shape[2]
    xp = jnp.pad(x, ((0, 0), (1, 1), (1, 1), (0, 0)))
    conv = jnp.zeros((B, H, W, CMID), jnp.float32)
    for di in range(3):
        for dj in range(3):
            conv = conv + jnp.einsum('bhwc,ck->bhwk',
                                     xp[:, di:di + H, dj:dj + W, :],
                                     wconv[3 * di + dj])
    conv = jnp.maximum(conv + bconv, 0.0)
    vis_out = conv.mean(axis=(1, 2)) @ wvis + bvis
    det_out = x.mean(axis=(1, 2)) @ wdet + bdet
    jot = jnp.concatenate([vis_out, det_out], axis=1)
    return jot @ whead + bhead


if __name__ == "__main__":
    # Small shapes consistent with forward(img) on an image batch.
    B, C, H, W = 2, 4, 16, 16
    CMID, VIS, DET, ODIM = 16, 24, 8, 5      # idim = VIS + DET = 32 (scaled-down 1512)
    IDIM = VIS + DET

    key = jax.random.PRNGKey(0)
    ks = jax.random.split(key, 9)
    img = jax.random.normal(ks[0], (B, C, H, W), jnp.float32)
    params = (
        0.1 * jax.random.normal(ks[1], (9, C, CMID), jnp.float32),   # conv weight (tap, in, out)
        0.1 * jax.random.normal(ks[2], (1, CMID), jnp.float32),      # conv bias
        0.1 * jax.random.normal(ks[3], (CMID, VIS), jnp.float32),    # vis fc weight
        0.1 * jax.random.normal(ks[4], (1, VIS), jnp.float32),       # vis fc bias
        0.1 * jax.random.normal(ks[5], (C, DET), jnp.float32),       # detrec fc weight
        0.1 * jax.random.normal(ks[6], (1, DET), jnp.float32),       # detrec fc bias
        0.1 * jax.random.normal(ks[7], (IDIM, ODIM), jnp.float32),   # head weight Linear(idim, odim)
        0.1 * jax.random.normal(ks[8], (1, ODIM), jnp.float32),      # head bias
    )

    ref = joint_vis_det_ref(img, params)

    # f32 streaming path: bit-for-bit-ish match to the reference.
    out = jax.block_until_ready(joint_vis_det_forward(img, params))
    assert out.shape == (B, ODIM), out.shape
    assert bool(jnp.all(jnp.isfinite(out)))
    assert bool(jnp.allclose(out, ref, atol=1e-3, rtol=1e-3)), (out, ref)

    # bf16 streaming path (v5e/v6e/v7x HBM-traffic optimization): looser tolerance.
    out_bf16 = jax.block_until_ready(
        joint_vis_det_forward(img, params, stream_dtype=jnp.bfloat16))
    assert out_bf16.shape == (B, ODIM), out_bf16.shape
    assert bool(jnp.allclose(out_bf16, ref, atol=1e-2, rtol=1e-2)), (out_bf16, ref)

    print("KERNEL_OK")
</pallas_src>

<mosaic_0001>
module attributes {stable_mosaic.version = 11 : i64} {
  func.func @kernel(%arg0: i32, %arg1: memref<1x18x128xf32, #tpu.memory_space<vmem>>, %arg2: memref<384x256xf32, #tpu.memory_space<vmem>>, %arg3: memref<1x256xf32, #tpu.memory_space<vmem>>, %arg4: memref<256x24xf32, #tpu.memory_space<vmem>>, %arg5: memref<1x24xf32, #tpu.memory_space<vmem>>, %arg6: memref<128x8xf32, #tpu.memory_space<vmem>>, %arg7: memref<1x8xf32, #tpu.memory_space<vmem>>, %arg8: memref<24x128xf32, #tpu.memory_space<vmem>>, %arg9: memref<8x128xf32, #tpu.memory_space<vmem>>, %arg10: memref<1x128xf32, #tpu.memory_space<vmem>>, %arg11: memref<1x1x128xf32, #tpu.memory_space<vmem>>) attributes {dimension_semantics = [#tpu.dimension_semantics<parallel>], iteration_bounds = array<i64: 2>, scalar_prefetch = 0 : i64, scratch_operands = 0 : i64, tpu.core_type = #tpu.core_type<tc>, window_params = [{transform_indices = @transform_0, window_bounds = array<i64: 1, 18, 128>}, {pipeline_mode = #tpu.pipeline_mode<synchronous>, transform_indices = @transform_1, window_bounds = array<i64: 384, 256>}, {pipeline_mode = #tpu.pipeline_mode<synchronous>, transform_indices = @transform_2, window_bounds = array<i64: 1, 256>}, {pipeline_mode = #tpu.pipeline_mode<synchronous>, transform_indices = @transform_3, window_bounds = array<i64: 256, 24>}, {pipeline_mode = #tpu.pipeline_mode<synchronous>, transform_indices = @transform_4, window_bounds = array<i64: 1, 24>}, {pipeline_mode = #tpu.pipeline_mode<synchronous>, transform_indices = @transform_5, window_bounds = array<i64: 128, 8>}, {pipeline_mode = #tpu.pipeline_mode<synchronous>, transform_indices = @transform_6, window_bounds = array<i64: 1, 8>}, {pipeline_mode = #tpu.pipeline_mode<synchronous>, transform_indices = @transform_7, window_bounds = array<i64: 24, 128>}, {pipeline_mode = #tpu.pipeline_mode<synchronous>, transform_indices = @transform_8, window_bounds = array<i64: 8, 128>}, {pipeline_mode = #tpu.pipeline_mode<synchronous>, transform_indices = @transform_9, window_bounds = array<i64: 1, 128>}, {transform_indices = @transform_10, window_bounds = array<i64: 1, 1, 128>}]} {
    %cst = arith.constant 0.000000e+00 : f32
    %0 = vector.broadcast %cst : f32 to vector<1x256xf32>
    %cst_0 = arith.constant 0.000000e+00 : f32
    %1 = vector.broadcast %cst_0 : f32 to vector<1x128xf32>
    %c0 = arith.constant 0 : index
    %c0_1 = arith.constant 0 : index
    %c0_2 = arith.constant 0 : index
    %2 = vector.load %arg1[%c0, %c0_1, %c0_2] : memref<1x18x128xf32, #tpu.memory_space<vmem>>, vector<1x18x128xf32>
    %3 = vector.shape_cast %2 : vector<1x18x128xf32> to vector<18x128xf32>
    %4 = vector.extract_strided_slice %3 {offsets = [0, 0], sizes = [16, 128], strides = [1, 1]} : vector<18x128xf32> to vector<16x128xf32>
    %5 = vector.extract_strided_slice %3 {offsets = [1, 0], sizes = [16, 128], strides = [1, 1]} : vector<18x128xf32> to vector<16x128xf32>
    %6 = vector.extract_strided_slice %3 {offsets = [2, 0], sizes = [16, 128], strides = [1, 1]} : vector<18x128xf32> to vector<16x128xf32>
    %7 = tpu.concatenate %4, %5, %6 in 1 : vector<16x128xf32>, vector<16x128xf32>, vector<16x128xf32> -> vector<16x384xf32>
    %c0_3 = arith.constant 0 : index
    %c0_4 = arith.constant 0 : index
    %8 = vector.load %arg2[%c0_3, %c0_4] : memref<384x256xf32, #tpu.memory_space<vmem>>, vector<384x256xf32>
    %cst_5 = arith.constant dense<0.000000e+00> : vector<16x256xf32>
    %9 = tpu.matmul %7, %8, %cst_5 {dimension_numbers = #tpu.dot_dimension_numbers<[1], [0], [0], [1], [0, 0, 1, 1], [], []>} : vector<16x384xf32>, vector<384x256xf32>, vector<16x256xf32> -> vector<16x256xf32>
    %c0_6 = arith.constant 0 : index
    %c0_7 = arith.constant 0 : index
    %10 = vector.load %arg3[%c0_6, %c0_7] : memref<1x256xf32, #tpu.memory_space<vmem>>, vector<1x256xf32>
    %11 = vector.broadcast %10 : vector<1x256xf32> to vector<16x256xf32>
    %12 = arith.addf %9, %11 : vector<16x256xf32>
    %cst_8 = arith.constant 0.000000e+00 : f32
    %13 = vector.broadcast %cst_8 : f32 to vector<16x256xf32>
    %14 = arith.maximumf %12, %13 : vector<16x256xf32>
    %cst_9 = arith.constant dense<0.000000e+00> : vector<256xf32>
    %15 = vector.multi_reduction <add>, %14, %cst_9 [0] : vector<16x256xf32> to vector<256xf32>
    %16 = vector.shape_cast %15 : vector<256xf32> to vector<1x256xf32>
    %17 = arith.addf %0, %16 : vector<1x256xf32>
    %cst_10 = arith.constant dense<0.000000e+00> : vector<128xf32>
    %18 = vector.multi_reduction <add>, %5, %cst_10 [0] : vector<16x128xf32> to vector<128xf32>
    %19 = vector.shape_cast %18 : vector<128xf32> to vector<1x128xf32>
    %20 = arith.addf %1, %19 : vector<1x128xf32>
    %cst_11 = arith.constant 3.906250e-03 : f32
    %21 = vector.broadcast %cst_11 : f32 to vector<1x256xf32>
    %22 = arith.mulf %17, %21 : vector<1x256xf32>
    %c0_12 = arith.constant 0 : index
    %c0_13 = arith.constant 0 : index
    %23 = vector.load %arg4[%c0_12, %c0_13] : memref<256x24xf32, #tpu.memory_space<vmem>>, vector<256x24xf32>
    %cst_14 = arith.constant dense<0.000000e+00> : vector<1x24xf32>
    %24 = tpu.matmul %22, %23, %cst_14 {dimension_numbers = #tpu.dot_dimension_numbers<[1], [0], [0], [1], [0, 0, 1, 1], [], []>} : vector<1x256xf32>, vector<256x24xf32>, vector<1x24xf32> -> vector<1x24xf32>
    %c0_15 = arith.constant 0 : index
    %c0_16 = arith.constant 0 : index
    %25 = vector.load %arg5[%c0_15, %c0_16] : memref<1x24xf32, #tpu.memory_space<vmem>>, vector<1x24xf32>
    %26 = arith.addf %24, %25 : vector<1x24xf32>
    %cst_17 = arith.constant 3.906250e-03 : f32
    %27 = vector.broadcast %cst_17 : f32 to vector<1x128xf32>
    %28 = arith.mulf %20, %27 : vector<1x128xf32>
    %c0_18 = arith.constant 0 : index
    %c0_19 = arith.constant 0 : index
    %29 = vector.load %arg6[%c0_18, %c0_19] : memref<128x8xf32, #tpu.memory_space<vmem>>, vector<128x8xf32>
    %cst_20 = arith.constant dense<0.000000e+00> : vector<1x8xf32>
    %30 = tpu.matmul %28, %29, %cst_20 {dimension_numbers = #tpu.dot_dimension_numbers<[1], [0], [0], [1], [0, 0, 1, 1], [], []>} : vector<1x128xf32>, vector<128x8xf32>, vector<1x8xf32> -> vector<1x8xf32>
    %c0_21 = arith.constant 0 : index
    %c0_22 = arith.constant 0 : index
    %31 = vector.load %arg7[%c0_21, %c0_22] : memref<1x8xf32, #tpu.memory_space<vmem>>, vector<1x8xf32>
    %32 = arith.addf %30, %31 : vector<1x8xf32>
    %c0_23 = arith.constant 0 : index
    %c0_24 = arith.constant 0 : index
    %33 = vector.load %arg8[%c0_23, %c0_24] : memref<24x128xf32, #tpu.memory_space<vmem>>, vector<24x128xf32>
    %cst_25 = arith.constant dense<0.000000e+00> : vector<1x128xf32>
    %34 = tpu.matmul %26, %33, %cst_25 {dimension_numbers = #tpu.dot_dimension_numbers<[1], [0], [0], [1], [0, 0, 1, 1], [], []>} : vector<1x24xf32>, vector<24x128xf32>, vector<1x128xf32> -> vector<1x128xf32>
    %c0_26 = arith.constant 0 : index
    %c0_27 = arith.constant 0 : index
    %35 = vector.load %arg9[%c0_26, %c0_27] : memref<8x128xf32, #tpu.memory_space<vmem>>, vector<8x128xf32>
    %cst_28 = arith.constant dense<0.000000e+00> : vector<1x128xf32>
    %36 = tpu.matmul %32, %35, %cst_28 {dimension_numbers = #tpu.dot_dimension_numbers<[1], [0], [0], [1], [0, 0, 1, 1], [], []>} : vector<1x8xf32>, vector<8x128xf32>, vector<1x128xf32> -> vector<1x128xf32>
    %37 = arith.addf %34, %36 : vector<1x128xf32>
    %c0_29 = arith.constant 0 : index
    %c0_30 = arith.constant 0 : index
    %38 = vector.load %arg10[%c0_29, %c0_30] : memref<1x128xf32, #tpu.memory_space<vmem>>, vector<1x128xf32>
    %39 = arith.addf %37, %38 : vector<1x128xf32>
    %40 = vector.shape_cast %39 : vector<1x128xf32> to vector<1x1x128xf32>
    %c0_31 = arith.constant 0 : index
    %c0_32 = arith.constant 0 : index
    %c0_33 = arith.constant 0 : index
    %41 = vector.load %arg11[%c0_31, %c0_32, %c0_33] : memref<1x1x128xf32, #tpu.memory_space<vmem>>, vector<1x1x128xf32>
    tpu.vector_store %arg11[%c0_31, %c0_32, %c0_33], %40 {strides = array<i32>} : memref<1x1x128xf32, #tpu.memory_space<vmem>>, vector<1x1x128xf32>,
    return
  }
  func.func @transform_0(%arg0: i32) -> (i32, i32, i32) {
    %c0_i32 = arith.constant 0 : i32
    %c0_i32_0 = arith.constant 0 : i32
    %c0_i32_1 = arith.constant 0 : i32
    return %arg0, %c0_i32, %c0_i32_0 : i32, i32, i32
  }
  func.func @transform_1(%arg0: i32) -> (i32, i32) {
    %c0_i32 = arith.constant 0 : i32
    %c0_i32_0 = arith.constant 0 : i32
    %c0_i32_1 = arith.constant 0 : i32
    return %c0_i32, %c0_i32_0 : i32, i32
  }
  func.func @transform_2(%arg0: i32) -> (i32, i32) {
    %c0_i32 = arith.constant 0 : i32
    %c0_i32_0 = arith.constant 0 : i32
    %c0_i32_1 = arith.constant 0 : i32
    return %c0_i32, %c0_i32_0 : i32, i32
  }
  func.func @transform_3(%arg0: i32) -> (i32, i32) {
    %c0_i32 = arith.constant 0 : i32
    %c0_i32_0 = arith.constant 0 : i32
    %c0_i32_1 = arith.constant 0 : i32
    return %c0_i32, %c0_i32_0 : i32, i32
  }
  func.func @transform_4(%arg0: i32) -> (i32, i32) {
    %c0_i32 = arith.constant 0 : i32
    %c0_i32_0 = arith.constant 0 : i32
    %c0_i32_1 = arith.constant 0 : i32
    return %c0_i32, %c0_i32_0 : i32, i32
  }
  func.func @transform_5(%arg0: i32) -> (i32, i32) {
    %c0_i32 = arith.constant 0 : i32
    %c0_i32_0 = arith.constant 0 : i32
    %c0_i32_1 = arith.constant 0 : i32
    return %c0_i32, %c0_i32_0 : i32, i32
  }
  func.func @transform_6(%arg0: i32) -> (i32, i32) {
    %c0_i32 = arith.constant 0 : i32
    %c0_i32_0 = arith.constant 0 : i32
    %c0_i32_1 = arith.constant 0 : i32
    return %c0_i32, %c0_i32_0 : i32, i32
  }
  func.func @transform_7(%arg0: i32) -> (i32, i32) {
    %c0_i32 = arith.constant 0 : i32
    %c0_i32_0 = arith.constant 0 : i32
    %c0_i32_1 = arith.constant 0 : i32
    return %c0_i32, %c0_i32_0 : i32, i32
  }
  func.func @transform_8(%arg0: i32) -> (i32, i32) {
    %c0_i32 = arith.constant 0 : i32
    %c0_i32_0 = arith.constant 0 : i32
    %c0_i32_1 = arith.constant 0 : i32
    return %c0_i32, %c0_i32_0 : i32, i32
  }
  func.func @transform_9(%arg0: i32) -> (i32, i32) {
    %c0_i32 = arith.constant 0 : i32
    %c0_i32_0 = arith.constant 0 : i32
    %c0_i32_1 = arith.constant 0 : i32
    return %c0_i32, %c0_i32_0 : i32, i32
  }
  func.func @transform_10(%arg0: i32) -> (i32, i32, i32) {
    %c0_i32 = arith.constant 0 : i32
    %c0_i32_0 = arith.constant 0 : i32
    %c0_i32_1 = arith.constant 0 : i32
    return %arg0, %c0_i32, %c0_i32_0 : i32, i32, i32
  }
}

module attributes {stable_mosaic.version = 11 : i64} {
  func.func @kernel(%arg0: i32, %arg1: memref<1x18x128xf32, #tpu.memory_space<vmem>>, %arg2: memref<384x256xf32, #tpu.memory_space<vmem>>, %arg3: memref<1x256xf32, #tpu.memory_space<vmem>>, %arg4: memref<256x24xf32, #tpu.memory_space<vmem>>, %arg5: memref<1x24xf32, #tpu.memory_space<vmem>>, %arg6: memref<128x8xf32, #tpu.memory_space<vmem>>, %arg7: memref<1x8xf32, #tpu.memory_space<vmem>>, %arg8: memref<24x128xf32, #tpu.memory_space<vmem>>, %arg9: memref<8x128xf32, #tpu.memory_space<vmem>>, %arg10: memref<1x128xf32, #tpu.memory_space<vmem>>, %arg11: memref<1x1x128xf32, #tpu.memory_space<vmem>>) attributes {dimension_semantics = [#tpu.dimension_semantics<parallel>], iteration_bounds = array<i64: 2>, scalar_prefetch = 0 : i64, scratch_operands = 0 : i64, tpu.core_type = #tpu.core_type<tc>, window_params = [{transform_indices = @transform_0, window_bounds = array<i64: 1, 18, 128>}, {pipeline_mode = #tpu.pipeline_mode<synchronous>, transform_indices = @transform_1, window_bounds = array<i64: 384, 256>}, {pipeline_mode = #tpu.pipeline_mode<synchronous>, transform_indices = @transform_2, window_bounds = array<i64: 1, 256>}, {pipeline_mode = #tpu.pipeline_mode<synchronous>, transform_indices = @transform_3, window_bounds = array<i64: 256, 24>}, {pipeline_mode = #tpu.pipeline_mode<synchronous>, transform_indices = @transform_4, window_bounds = array<i64: 1, 24>}, {pipeline_mode = #tpu.pipeline_mode<synchronous>, transform_indices = @transform_5, window_bounds = array<i64: 128, 8>}, {pipeline_mode = #tpu.pipeline_mode<synchronous>, transform_indices = @transform_6, window_bounds = array<i64: 1, 8>}, {pipeline_mode = #tpu.pipeline_mode<synchronous>, transform_indices = @transform_7, window_bounds = array<i64: 24, 128>}, {pipeline_mode = #tpu.pipeline_mode<synchronous>, transform_indices = @transform_8, window_bounds = array<i64: 8, 128>}, {pipeline_mode = #tpu.pipeline_mode<synchronous>, transform_indices = @transform_9, window_bounds = array<i64: 1, 128>}, {transform_indices = @transform_10, window_bounds = array<i64: 1, 1, 128>}]} {
    %cst = arith.constant 0.000000e+00 : f32
    %0 = vector.broadcast %cst : f32 to vector<1x256xf32>
    %cst_0 = arith.constant 0.000000e+00 : f32
    %1 = vector.broadcast %cst_0 : f32 to vector<1x128xf32>
    %c0 = arith.constant 0 : index
    %c0_1 = arith.constant 0 : index
    %c0_2 = arith.constant 0 : index
    %2 = vector.load %arg1[%c0, %c0_1, %c0_2] : memref<1x18x128xf32, #tpu.memory_space<vmem>>, vector<1x18x128xf32>
    %3 = vector.shape_cast %2 : vector<1x18x128xf32> to vector<18x128xf32>
    %4 = vector.extract_strided_slice %3 {offsets = [0, 0], sizes = [16, 128], strides = [1, 1]} : vector<18x128xf32> to vector<16x128xf32>
    %5 = vector.extract_strided_slice %3 {offsets = [1, 0], sizes = [16, 128], strides = [1, 1]} : vector<18x128xf32> to vector<16x128xf32>
    %6 = vector.extract_strided_slice %3 {offsets = [2, 0], sizes = [16, 128], strides = [1, 1]} : vector<18x128xf32> to vector<16x128xf32>
    %7 = tpu.concatenate %4, %5, %6 in 1 : vector<16x128xf32>, vector<16x128xf32>, vector<16x128xf32> -> vector<16x384xf32>
    %c0_3 = arith.constant 0 : index
    %c0_4 = arith.constant 0 : index
    %8 = vector.load %arg2[%c0_3, %c0_4] : memref<384x256xf32, #tpu.memory_space<vmem>>, vector<384x256xf32>
    %cst_5 = arith.constant dense<0.000000e+00> : vector<16x256xf32>
    %9 = tpu.matmul %7, %8, %cst_5 {dimension_numbers = #tpu.dot_dimension_numbers<[1], [0], [0], [1], [0, 0, 1, 1], [], []>} : vector<16x384xf32>, vector<384x256xf32>, vector<16x256xf32> -> vector<16x256xf32>
    %c0_6 = arith.constant 0 : index
    %c0_7 = arith.constant 0 : index
    %10 = vector.load %arg3[%c0_6, %c0_7] : memref<1x256xf32, #tpu.memory_space<vmem>>, vector<1x256xf32>
    %11 = vector.broadcast %10 : vector<1x256xf32> to vector<16x256xf32>
    %12 = arith.addf %9, %11 : vector<16x256xf32>
    %cst_8 = arith.constant 0.000000e+00 : f32
    %13 = vector.broadcast %cst_8 : f32 to vector<16x256xf32>
    %14 = arith.maximumf %12, %13 : vector<16x256xf32>
    %cst_9 = arith.constant dense<0.000000e+00> : vector<256xf32>
    %15 = vector.multi_reduction <add>, %14, %cst_9 [0] : vector<16x256xf32> to vector<256xf32>
    %16 = vector.shape_cast %15 : vector<256xf32> to vector<1x256xf32>
    %17 = arith.addf %0, %16 : vector<1x256xf32>
    %cst_10 = arith.constant dense<0.000000e+00> : vector<128xf32>
    %18 = vector.multi_reduction <add>, %5, %cst_10 [0] : vector<16x128xf32> to vector<128xf32>
    %19 = vector.shape_cast %18 : vector<128xf32> to vector<1x128xf32>
    %20 = arith.addf %1, %19 : vector<1x128xf32>
    %cst_11 = arith.constant 3.906250e-03 : f32
    %21 = vector.broadcast %cst_11 : f32 to vector<1x256xf32>
    %22 = arith.mulf %17, %21 : vector<1x256xf32>
    %c0_12 = arith.constant 0 : index
    %c0_13 = arith.constant 0 : index
    %23 = vector.load %arg4[%c0_12, %c0_13] : memref<256x24xf32, #tpu.memory_space<vmem>>, vector<256x24xf32>
    %cst_14 = arith.constant dense<0.000000e+00> : vector<1x24xf32>
    %24 = tpu.matmul %22, %23, %cst_14 {dimension_numbers = #tpu.dot_dimension_numbers<[1], [0], [0], [1], [0, 0, 1, 1], [], []>} : vector<1x256xf32>, vector<256x24xf32>, vector<1x24xf32> -> vector<1x24xf32>
    %c0_15 = arith.constant 0 : index
    %c0_16 = arith.constant 0 : index
    %25 = vector.load %arg5[%c0_15, %c0_16] : memref<1x24xf32, #tpu.memory_space<vmem>>, vector<1x24xf32>
    %26 = arith.addf %24, %25 : vector<1x24xf32>
    %cst_17 = arith.constant 3.906250e-03 : f32
    %27 = vector.broadcast %cst_17 : f32 to vector<1x128xf32>
    %28 = arith.mulf %20, %27 : vector<1x128xf32>
    %c0_18 = arith.constant 0 : index
    %c0_19 = arith.constant 0 : index
    %29 = vector.load %arg6[%c0_18, %c0_19] : memref<128x8xf32, #tpu.memory_space<vmem>>, vector<128x8xf32>
    %cst_20 = arith.constant dense<0.000000e+00> : vector<1x8xf32>
    %30 = tpu.matmul %28, %29, %cst_20 {dimension_numbers = #tpu.dot_dimension_numbers<[1], [0], [0], [1], [0, 0, 1, 1], [], []>} : vector<1x128xf32>, vector<128x8xf32>, vector<1x8xf32> -> vector<1x8xf32>
    %c0_21 = arith.constant 0 : index
    %c0_22 = arith.constant 0 : index
    %31 = vector.load %arg7[%c0_21, %c0_22] : memref<1x8xf32, #tpu.memory_space<vmem>>, vector<1x8xf32>
    %32 = arith.addf %30, %31 : vector<1x8xf32>
    %c0_23 = arith.constant 0 : index
    %c0_24 = arith.constant 0 : index
    %33 = vector.load %arg8[%c0_23, %c0_24] : memref<24x128xf32, #tpu.memory_space<vmem>>, vector<24x128xf32>
    %cst_25 = arith.constant dense<0.000000e+00> : vector<1x128xf32>
    %34 = tpu.matmul %26, %33, %cst_25 {dimension_numbers = #tpu.dot_dimension_numbers<[1], [0], [0], [1], [0, 0, 1, 1], [], []>} : vector<1x24xf32>, vector<24x128xf32>, vector<1x128xf32> -> vector<1x128xf32>
    %c0_26 = arith.constant 0 : index
    %c0_27 = arith.constant 0 : index
    %35 = vector.load %arg9[%c0_26, %c0_27] : memref<8x128xf32, #tpu.memory_space<vmem>>, vector<8x128xf32>
    %cst_28 = arith.constant dense<0.000000e+00> : vector<1x128xf32>
    %36 = tpu.matmul %32, %35, %cst_28 {dimension_numbers = #tpu.dot_dimension_numbers<[1], [0], [0], [1], [0, 0, 1, 1], [], []>} : vector<1x8xf32>, vector<8x128xf32>, vector<1x128xf32> -> vector<1x128xf32>
    %37 = arith.addf %34, %36 : vector<1x128xf32>
    %c0_29 = arith.constant 0 : index
    %c0_30 = arith.constant 0 : index
    %38 = vector.load %arg10[%c0_29, %c0_30] : memref<1x128xf32, #tpu.memory_space<vmem>>, vector<1x128xf32>
    %39 = arith.addf %37, %38 : vector<1x128xf32>
    %40 = vector.shape_cast %39 : vector<1x128xf32> to vector<1x1x128xf32>
    %c0_31 = arith.constant 0 : index
    %c0_32 = arith.constant 0 : index
    %c0_33 = arith.constant 0 : index
    %41 = vector.load %arg11[%c0_31, %c0_32, %c0_33] : memref<1x1x128xf32, #tpu.memory_space<vmem>>, vector<1x1x128xf32>
    tpu.vector_store %arg11[%c0_31, %c0_32, %c0_33], %40 {strides = array<i32>} : memref<1x1x128xf32, #tpu.memory_space<vmem>>, vector<1x1x128xf32>,
    return
  }
  func.func @transform_0(%arg0: i32) -> (i32, i32, i32) {
    %c0_i32 = arith.constant 0 : i32
    %c0_i32_0 = arith.constant 0 : i32
    %c0_i32_1 = arith.constant 0 : i32
    return %arg0, %c0_i32, %c0_i32_0 : i32, i32, i32
  }
  func.func @transform_1(%arg0: i32) -> (i32, i32) {
    %c0_i32 = arith.constant 0 : i32
    %c0_i32_0 = arith.constant 0 : i32
    %c0_i32_1 = arith.constant 0 : i32
    return %c0_i32, %c0_i32_0 : i32, i32
  }
  func.func @transform_2(%arg0: i32) -> (i32, i32) {
    %c0_i32 = arith.constant 0 : i32
    %c0_i32_0 = arith.constant 0 : i32
    %c0_i32_1 = arith.constant 0 : i32
    return %c0_i32, %c0_i32_0 : i32, i32
  }
  func.func @transform_3(%arg0: i32) -> (i32, i32) {
    %c0_i32 = arith.constant 0 : i32
    %c0_i32_0 = arith.constant 0 : i32
    %c0_i32_1 = arith.constant 0 : i32
    return %c0_i32, %c0_i32_0 : i32, i32
  }
  func.func @transform_4(%arg0: i32) -> (i32, i32) {
    %c0_i32 = arith.constant 0 : i32
    %c0_i32_0 = arith.constant 0 : i32
    %c0_i32_1 = arith.constant 0 : i32
    return %c0_i32, %c0_i32_0 : i32, i32
  }
  func.func @transform_5(%arg0: i32) -> (i32, i32) {
    %c0_i32 = arith.constant 0 : i32
    %c0_i32_0 = arith.constant 0 : i32
    %c0_i32_1 = arith.constant 0 : i32
    return %c0_i32, %c0_i32_0 : i32, i32
  }
  func.func @transform_6(%arg0: i32) -> (i32, i32) {
    %c0_i32 = arith.constant 0 : i32
    %c0_i32_0 = arith.constant 0 : i32
    %c0_i32_1 = arith.constant 0 : i32
    return %c0_i32, %c0_i32_0 : i32, i32
  }
  func.func @transform_7(%arg0: i32) -> (i32, i32) {
    %c0_i32 = arith.constant 0 : i32
    %c0_i32_0 = arith.constant 0 : i32
    %c0_i32_1 = arith.constant 0 : i32
    return %c0_i32, %c0_i32_0 : i32, i32
  }
  func.func @transform_8(%arg0: i32) -> (i32, i32) {
    %c0_i32 = arith.constant 0 : i32
    %c0_i32_0 = arith.constant 0 : i32
    %c0_i32_1 = arith.constant 0 : i32
    return %c0_i32, %c0_i32_0 : i32, i32
  }
  func.func @transform_9(%arg0: i32) -> (i32, i32) {
    %c0_i32 = arith.constant 0 : i32
    %c0_i32_0 = arith.constant 0 : i32
    %c0_i32_1 = arith.constant 0 : i32
    return %c0_i32, %c0_i32_0 : i32, i32
  }
  func.func @transform_10(%arg0: i32) -> (i32, i32, i32) {
    %c0_i32 = arith.constant 0 : i32
    %c0_i32_0 = arith.constant 0 : i32
    %c0_i32_1 = arith.constant 0 : i32
    return %arg0, %c0_i32, %c0_i32_0 : i32, i32, i32
  }
}

</mosaic_0001>

<llo_original>
// kernel: tpu_custom_call.1
$region0: #{tpu_custom_call.1}
  #allocation0 [shape = 'u32[]', space=smem, size = 0x4, offset = 0x4, fixed_abs, tag = 'smem constant byte address 0x4 - core index']
  #allocation1 [shape = 'u32[144,128]{1,0:T(1,128)}', space=vmem, size = 0x12000, scoped, tag = 'internal scratch']
  %s0 = inlined_call_operand.vmem [shape: f32[2,18,128], index: 0, kind: input, shape index: {}]
  %s1 = inlined_call_operand.hbm [shape: f32[384,256], index: 1, kind: input, shape index: {}]
  %s2 = inlined_call_operand.vmem [shape: f32[1,256], index: 2, kind: input, shape index: {}]
  %s3 = inlined_call_operand.vmem [shape: f32[256,24], index: 3, kind: input, shape index: {}]
  %s4 = inlined_call_operand.vmem [shape: f32[1,24], index: 4, kind: input, shape index: {}]
  %s5 = inlined_call_operand.vmem [shape: f32[128,8], index: 5, kind: input, shape index: {}]
  %s6 = inlined_call_operand.vmem [shape: f32[1,8], index: 6, kind: input, shape index: {}]
  %s7 = inlined_call_operand.vmem [shape: f32[24,128], index: 7, kind: input, shape index: {}]
  %s8 = inlined_call_operand.vmem [shape: f32[8,128], index: 8, kind: input, shape index: {}]
  %s9 = inlined_call_operand.vmem [shape: f32[1,128], index: 9, kind: input, shape index: {}]
  %s10 = inlined_call_operand.hbm [shape: f32[2,1,128], index: 10, kind: output, shape index: {}]
  %s11 = sld [smem:[#allocation0]]
  $region77: #{tpu_custom_call.1} parent=0
    _
  %s13 = ssub.s32 1, %s11
  %s14 = scalar_select 0, %s13, %s11
  $region1: #{tpu_custom_call.1} parent=0
    #allocation2 [shape = 'u8[393216]{0}', space=vmem, size = 0x60000, scoped, tag = 'input window, operand 1, single buffered']
    #allocation3 [shape = 's32[2]{0}', space=sflag, size = 0x8, scoped, tag = 'scoped memory for tpu_custom_call.1']
    #allocation4 [shape = 's32[2]{0}', space=sflag, size = 0x8, scoped, tag = 'scoped memory for tpu_custom_call.1']
    #allocation5 [shape = 'u8[1024]{0}', space=vmem, size = 0x400, scoped, tag = 'output window, operand 0']
    %15 = vsyncpa [#allocation3], 0
    %16 = vsyncpa [#allocation4], 0
    %s17 = scalar_lea.sflag [#allocation4], 1
    %18 = vsyncpa %s17, 0
    loop: start=0, step=1, limit=4
    $region2: #{tpu_custom_call.1} parent=1 // loop_pre_header
      _
    $region3: #{tpu_custom_call.1} parent=1 // loop_header
      %s20 = sphi 0, %s24
      %p21 = scmp.ge.s32.totalorder %s20, 4
      %s30 = sphi 0, %s32
      %s33 = sphi 0, %s30
      %s34 = sphi 0, %s33
      %s50 = sphi 0, %s34
      %s54 = sphi 0, %s54
      %s56 = sphi 0, %s54
      %s57 = sphi 0, %s56
      %s71 = sphi 0, %s57
      %s75 = sphi 0, %s75
      %s77 = sphi 0, %s75
      %s78 = sphi 0, %s77
      %s92 = sphi 0, %s78
      %s96 = sphi 0, %s96
      %s98 = sphi 0, %s96
      %s99 = sphi 0, %s98
      %s113 = sphi 0, %s99
      %s117 = sphi 0, %s117
      %s119 = sphi 0, %s117
      %s120 = sphi 0, %s119
      %s134 = sphi 0, %s120
      %s138 = sphi 0, %s138
      %s140 = sphi 0, %s138
      %s141 = sphi 0, %s140
      %s155 = sphi 0, %s141
      %s159 = sphi 0, %s159
      %s161 = sphi 0, %s159
      %s162 = sphi 0, %s161
      %s176 = sphi 0, %s162
      %s180 = sphi 0, %s180
      %s182 = sphi 0, %s180
      %s183 = sphi 0, %s182
      %s197 = sphi 0, %s183
      %s201 = sphi 0, %s201
      %s203 = sphi 0, %s201
      %s204 = sphi 0, %s203
      %s218 = sphi 0, %s204
      %s222 = sphi 0, %s222
      %s224 = sphi 0, %s222
      %s225 = sphi 0, %s224
      %s239 = sphi 0, %s225
      %s245 = sphi 0, %s247
      %s248 = sphi 0, %s245
      %s249 = sphi 0, %s248
      %s265 = sphi 0, %s249
    $region4: #{tpu_custom_call.1} parent=1 // loop_header_branch
      %23 = sbr.rel (%p21) target = $region8
    $region5: #{tpu_custom_call.1} parent=1 // loop_body
      %s25 = ssub.s32 %s20, 1
      %s26 = ssub.s32 %s20, 2
      %s27 = sadd.s32 %s20, 1
      %s28 = ssub.s32 %s20, %s27
      %p29 = scmp.eq.s32.totalorder %s28, 0
      %s31 = sadd.s32 %s30, 1
      %s32 = scalar_select %p29, %s30, %s31
      %p35 = pneg %p29
      %p36 = scmp.eq.s32.totalorder %s20, 1
      %p37 = por %p35, %p36
      %p38 = scmp.ne.s32.totalorder %s30, %s33
      %p39 = scmp.eq.s32.totalorder %s20, 0
      %p40 = por %p38, %p39
      %p41 = scmp.ne.s32.totalorder %s30, %s33
      %p42 = scmp.eq.s32.totalorder %s25, 1
      %p43 = por %p41, %p42
      %p44 = scmp.ne.s32.totalorder %s33, %s34
      %p45 = scmp.eq.s32.totalorder %s25, 0
      %p46 = por %p44, %p45
      %p47 = scmp.ne.s32.totalorder %s33, %s34
      %p48 = scmp.eq.s32.totalorder %s26, 1
      %p49 = por %p47, %p48
      %p51 = scmp.ne.s32.totalorder %s34, %s50
      %p52 = scmp.eq.s32.totalorder %s26, 0
      %p53 = por %p51, %p52
      %s55 = sadd.s32 %s54, 1
      %p58 = scmp.eq.s32.totalorder %s20, 1
      %p59 = scmp.ne.s32.totalorder %s54, %s56
      %p60 = scmp.eq.s32.totalorder %s20, 0
      %p61 = por %p59, %p60
      %p62 = scmp.ne.s32.totalorder %s54, %s56
      %p63 = scmp.eq.s32.totalorder %s25, 1
      %p64 = por %p62, %p63
      %p65 = scmp.ne.s32.totalorder %s56, %s57
      %p66 = scmp.eq.s32.totalorder %s25, 0
      %p67 = por %p65, %p66
      %p68 = scmp.ne.s32.totalorder %s56, %s57
      %p69 = scmp.eq.s32.totalorder %s26, 1
      %p70 = por %p68, %p69
      %p72 = scmp.ne.s32.totalorder %s57, %s71
      %p73 = scmp.eq.s32.totalorder %s26, 0
      %p74 = por %p72, %p73
      %s76 = sadd.s32 %s75, 1
      %p79 = scmp.eq.s32.totalorder %s20, 1
      %p80 = scmp.ne.s32.totalorder %s75, %s77
      %p81 = scmp.eq.s32.totalorder %s20, 0
      %p82 = por %p80, %p81
      %p83 = scmp.ne.s32.totalorder %s75, %s77
      %p84 = scmp.eq.s32.totalorder %s25, 1
      %p85 = por %p83, %p84
      %p86 = scmp.ne.s32.totalorder %s77, %s78
      %p87 = scmp.eq.s32.totalorder %s25, 0
      %p88 = por %p86, %p87
      %p89 = scmp.ne.s32.totalorder %s77, %s78
      %p90 = scmp.eq.s32.totalorder %s26, 1
      %p91 = por %p89, %p90
      %p93 = scmp.ne.s32.totalorder %s78, %s92
      %p94 = scmp.eq.s32.totalorder %s26, 0
      %p95 = por %p93, %p94
      %s97 = sadd.s32 %s96, 1
      %p100 = scmp.eq.s32.totalorder %s20, 1
      %p101 = scmp.ne.s32.totalorder %s96, %s98
      %p102 = scmp.eq.s32.totalorder %s20, 0
      %p103 = por %p101, %p102
      %p104 = scmp.ne.s32.totalorder %s96, %s98
      %p105 = scmp.eq.s32.totalorder %s25, 1
      %p106 = por %p104, %p105
      %p107 = scmp.ne.s32.totalorder %s98, %s99
      %p108 = scmp.eq.s32.totalorder %s25, 0
      %p109 = por %p107, %p108
      %p110 = scmp.ne.s32.totalorder %s98, %s99
      %p111 = scmp.eq.s32.totalorder %s26, 1
      %p112 = por %p110, %p111
      %p114 = scmp.ne.s32.totalorder %s99, %s113
      %p115 = scmp.eq.s32.totalorder %s26, 0
      %p116 = por %p114, %p115
      %s118 = sadd.s32 %s117, 1
      %p121 = scmp.eq.s32.totalorder %s20, 1
      %p122 = scmp.ne.s32.totalorder %s117, %s119
      %p123 = scmp.eq.s32.totalorder %s20, 0
      %p124 = por %p122, %p123
      %p125 = scmp.ne.s32.totalorder %s117, %s119
      %p126 = scmp.eq.s32.totalorder %s25, 1
      %p127 = por %p125, %p126
      %p128 = scmp.ne.s32.totalorder %s119, %s120
      %p129 = scmp.eq.s32.totalorder %s25, 0
      %p130 = por %p128, %p129
      %p131 = scmp.ne.s32.totalorder %s119, %s120
      %p132 = scmp.eq.s32.totalorder %s26, 1
      %p133 = por %p131, %p132
      %p135 = scmp.ne.s32.totalorder %s120, %s134
      %p136 = scmp.eq.s32.totalorder %s26, 0
      %p137 = por %p135, %p136
      %s139 = sadd.s32 %s138, 1
      %p142 = scmp.eq.s32.totalorder %s20, 1
      %p143 = scmp.ne.s32.totalorder %s138, %s140
      %p144 = scmp.eq.s32.totalorder %s20, 0
      %p145 = por %p143, %p144
      %p146 = scmp.ne.s32.totalorder %s138, %s140
      %p147 = scmp.eq.s32.totalorder %s25, 1
      %p148 = por %p146, %p147
      %p149 = scmp.ne.s32.totalorder %s140, %s141
      %p150 = scmp.eq.s32.totalorder %s25, 0
      %p151 = por %p149, %p150
      %p152 = scmp.ne.s32.totalorder %s140, %s141
      %p153 = scmp.eq.s32.totalorder %s26, 1
      %p154 = por %p152, %p153
      %p156 = scmp.ne.s32.totalorder %s141, %s155
      %p157 = scmp.eq.s32.totalorder %s26, 0
      %p158 = por %p156, %p157
      %s160 = sadd.s32 %s159, 1
      %p163 = scmp.eq.s32.totalorder %s20, 1
      %p164 = scmp.ne.s32.totalorder %s159, %s161
      %p165 = scmp.eq.s32.totalorder %s20, 0
      %p166 = por %p164, %p165
      %p167 = scmp.ne.s32.totalorder %s159, %s161
      %p168 = scmp.eq.s32.totalorder %s25, 1
      %p169 = por %p167, %p168
      %p170 = scmp.ne.s32.totalorder %s161, %s162
      %p171 = scmp.eq.s32.totalorder %s25, 0
      %p172 = por %p170, %p171
      %p173 = scmp.ne.s32.totalorder %s161, %s162
      %p174 = scmp.eq.s32.totalorder %s26, 1
      %p175 = por %p173, %p174
      %p177 = scmp.ne.s32.totalorder %s162, %s176
      %p178 = scmp.eq.s32.totalorder %s26, 0
      %p179 = por %p177, %p178
      %s181 = sadd.s32 %s180, 1
      %p184 = scmp.eq.s32.totalorder %s20, 1
      %p185 = scmp.ne.s32.totalorder %s180, %s182
      %p186 = scmp.eq.s32.totalorder %s20, 0
      %p187 = por %p185, %p186
      %p188 = scmp.ne.s32.totalorder %s180, %s182
      %p189 = scmp.eq.s32.totalorder %s25, 1
      %p190 = por %p188, %p189
      %p191 = scmp.ne.s32.totalorder %s182, %s183
      %p192 = scmp.eq.s32.totalorder %s25, 0
      %p193 = por %p191, %p192
      %p194 = scmp.ne.s32.totalorder %s182, %s183
      %p195 = scmp.eq.s32.totalorder %s26, 1
      %p196 = por %p194, %p195
      %p198 = scmp.ne.s32.totalorder %s183, %s197
      %p199 = scmp.eq.s32.totalorder %s26, 0
      %p200 = por %p198, %p199
      %s202 = sadd.s32 %s201, 1
      %p205 = scmp.eq.s32.totalorder %s20, 1
      %p206 = scmp.ne.s32.totalorder %s201, %s203
      %p207 = scmp.eq.s32.totalorder %s20, 0
      %p208 = por %p206, %p207
      %p209 = scmp.ne.s32.totalorder %s201, %s203
      %p210 = scmp.eq.s32.totalorder %s25, 1
      %p211 = por %p209, %p210
      %p212 = scmp.ne.s32.totalorder %s203, %s204
      %p213 = scmp.eq.s32.totalorder %s25, 0
      %p214 = por %p212, %p213
      %p215 = scmp.ne.s32.totalorder %s203, %s204
      %p216 = scmp.eq.s32.totalorder %s26, 1
      %p217 = por %p215, %p216
      %p219 = scmp.ne.s32.totalorder %s204, %s218
      %p220 = scmp.eq.s32.totalorder %s26, 0
      %p221 = por %p219, %p220
      %s223 = sadd.s32 %s222, 1
      %p226 = scmp.eq.s32.totalorder %s20, 1
      %p227 = scmp.ne.s32.totalorder %s222, %s224
      %p228 = scmp.eq.s32.totalorder %s20, 0
      %p229 = por %p227, %p228
      %p230 = scmp.ne.s32.totalorder %s222, %s224
      %p231 = scmp.eq.s32.totalorder %s25, 1
      %p232 = por %p230, %p231
      %p233 = scmp.ne.s32.totalorder %s224, %s225
      %p234 = scmp.eq.s32.totalorder %s25, 0
      %p235 = por %p233, %p234
      %p236 = scmp.ne.s32.totalorder %s224, %s225
      %p237 = scmp.eq.s32.totalorder %s26, 1
      %p238 = por %p236, %p237
      %p240 = scmp.ne.s32.totalorder %s225, %s239
      %p241 = scmp.eq.s32.totalorder %s26, 0
      %p242 = por %p240, %p241
      %s243 = ssub.s32 %s20, %s27
      %p244 = scmp.eq.s32.totalorder %s243, 0
      %s246 = sadd.s32 %s245, 1
      %s247 = scalar_select %p244, %s245, %s246
      %p250 = pneg %p244
      %p251 = scmp.eq.s32.totalorder %s20, 1
      %p252 = por %p250, %p251
      %p253 = scmp.ne.s32.totalorder %s245, %s248
      %p254 = scmp.eq.s32.totalorder %s20, 0
      %p255 = por %p253, %p254
      %p256 = scmp.ne.s32.totalorder %s245, %s248
      %p257 = scmp.eq.s32.totalorder %s25, 1
      %p258 = por %p256, %p257
      %p259 = scmp.ne.s32.totalorder %s248, %s249
      %p260 = scmp.eq.s32.totalorder %s25, 0
      %p261 = por %p259, %p260
      %p262 = scmp.ne.s32.totalorder %s248, %s249
      %p263 = scmp.eq.s32.totalorder %s26, 1
      %p264 = por %p262, %p263
      %p266 = scmp.ne.s32.totalorder %s249, %s265
      %p267 = scmp.eq.s32.totalorder %s26, 0
      %p268 = por %p266, %p267
      %p269 = scmp.le.s32.totalorder 1, %s20
      %p270 = scmp.lt.s32.totalorder %s20, 3
      %p271 = pnand %p269, %p270
      %p272 = pneg %p271
      // Predicated region
      $region9: #{tpu_custom_call.1} parent=5 // pred_check
        _
      $region10: #{tpu_custom_call.1} parent=5 // pred_check_branch
        %274 = sbr.rel (%p271) target = $region12
      $region11: #{tpu_custom_call.1} parent=5 // pred_region
        %s275 = ssub.s32 %s20, 1
        // Predicated region
        $region13: #{tpu_custom_call.1} parent=11 // pred_check
          %p276 = pneg %p67
        $region14: #{tpu_custom_call.1} parent=11 // pred_check_branch
          %278 = sbr.rel (%p276) target = $region16
        $region15: #{tpu_custom_call.1} parent=11 // pred_region
          %s280 = ssub.s32 12288, 12288
          %281 = vsyncadd [#allocation3], %s280
          %s282 = sshll.u32 [#allocation2], 4
          %s283 = int_to_ptr.vmem [resolvable:$true] %s282
          %288 = dma.hbm_to_vmem [thread:$0]  %s1, 12288, %s283, [#allocation3], 256, 256, 16
        $region16: #{tpu_custom_call.1} parent=11 // pred_fallthru
          _
        // Predicated region
        $region17: #{tpu_custom_call.1} parent=11 // pred_check
          %p289 = pneg %p88
        $region18: #{tpu_custom_call.1} parent=11 // pred_check_branch
          %291 = sbr.rel (%p289) target = $region20
        $region19: #{tpu_custom_call.1} parent=11 // pred_region
          _
        $region20: #{tpu_custom_call.1} parent=11 // pred_fallthru
          _
        // Predicated region
        $region21: #{tpu_custom_call.1} parent=11 // pred_check
          %p292 = pneg %p109
        $region22: #{tpu_custom_call.1} parent=11 // pred_check_branch
          %294 = sbr.rel (%p292) target = $region24
        $region23: #{tpu_custom_call.1} parent=11 // pred_region
          _
        $region24: #{tpu_custom_call.1} parent=11 // pred_fallthru
          _
        // Predicated region
        $region25: #{tpu_custom_call.1} parent=11 // pred_check
          %p295 = pneg %p130
        $region26: #{tpu_custom_call.1} parent=11 // pred_check_branch
          %297 = sbr.rel (%p295) target = $region28
        $region27: #{tpu_custom_call.1} parent=11 // pred_region
          _
        $region28: #{tpu_custom_call.1} parent=11 // pred_fallthru
          _
        // Predicated region
        $region29: #{tpu_custom_call.1} parent=11 // pred_check
          %p298 = pneg %p151
        $region30: #{tpu_custom_call.1} parent=11 // pred_check_branch
          %300 = sbr.rel (%p298) target = $region32
        $region31: #{tpu_custom_call.1} parent=11 // pred_region
          _
        $region32: #{tpu_custom_call.1} parent=11 // pred_fallthru
          _
        // Predicated region
        $region33: #{tpu_custom_call.1} parent=11 // pred_check
          %p301 = pneg %p172
        $region34: #{tpu_custom_call.1} parent=11 // pred_check_branch
          %303 = sbr.rel (%p301) target = $region36
        $region35: #{tpu_custom_call.1} parent=11 // pred_region
          _
        $region36: #{tpu_custom_call.1} parent=11 // pred_fallthru
          _
        // Predicated region
        $region37: #{tpu_custom_call.1} parent=11 // pred_check
          %p304 = pneg %p193
        $region38: #{tpu_custom_call.1} parent=11 // pred_check_branch
          %306 = sbr.rel (%p304) target = $region40
        $region39: #{tpu_custom_call.1} parent=11 // pred_region
          _
        $region40: #{tpu_custom_call.1} parent=11 // pred_fallthru
          _
        // Predicated region
        $region41: #{tpu_custom_call.1} parent=11 // pred_check
          %p307 = pneg %p214
        $region42: #{tpu_custom_call.1} parent=11 // pred_check_branch
          %309 = sbr.rel (%p307) target = $region44
        $region43: #{tpu_custom_call.1} parent=11 // pred_region
          _
        $region44: #{tpu_custom_call.1} parent=11 // pred_fallthru
          _
        // Predicated region
        $region45: #{tpu_custom_call.1} parent=11 // pred_check
          %p310 = pneg %p235
        $region46: #{tpu_custom_call.1} parent=11 // pred_check_branch
          %312 = sbr.rel (%p310) target = $region48
        $region47: #{tpu_custom_call.1} parent=11 // pred_region
          _
        $region48: #{tpu_custom_call.1} parent=11 // pred_fallthru
          _
      $region12: #{tpu_custom_call.1} parent=5 // pred_fallthru
        _
      %p313 = scmp.lt.s32.totalorder %s20, 2
      // Predicated region
      $region49: #{tpu_custom_call.1} parent=5 // pred_check
        %p314 = pneg %p313
      $region50: #{tpu_custom_call.1} parent=5 // pred_check_branch
        %316 = sbr.rel (%p314) target = $region52
      $region51: #{tpu_custom_call.1} parent=5 // pred_region
        // Predicated region
        $region53: #{tpu_custom_call.1} parent=51 // pred_check
          %p317 = pneg %p40
        $region54: #{tpu_custom_call.1} parent=51 // pred_check_branch
          %319 = sbr.rel (%p317) target = $region56
        $region55: #{tpu_custom_call.1} parent=51 // pred_region
          %p320 = scmp.lt.s32.totalorder %s20, 1
          %s321 = scalar_select %p320, %s20, 1
          %s322 = smul.addr %s321, 3
          %s323 = smul.addr %s322, 8
          %s324 = scalar_lea.vmem %s0, %s323
        $region56: #{tpu_custom_call.1} parent=51 // pred_fallthru
          _
      $region52: #{tpu_custom_call.1} parent=5 // pred_fallthru
        _
      %p325 = scmp.le.s32.totalorder 1, %s20
      %p326 = scmp.lt.s32.totalorder %s20, 3
      %p327 = pnand %p325, %p326
      %p328 = pneg %p327
      // Predicated region
      $region57: #{tpu_custom_call.1} parent=5 // pred_check
        _
      $region58: #{tpu_custom_call.1} parent=5 // pred_check_branch
        %330 = sbr.rel (%p327) target = $region60
      $region59: #{tpu_custom_call.1} parent=5 // pred_region
        %s331 = ssub.s32 %s20, 1
        // Predicated region
        $region61: #{tpu_custom_call.1} parent=59 // pred_check
          %p332 = pneg %p67
        $region62: #{tpu_custom_call.1} parent=59 // pred_check_branch
          %334 = sbr.rel (%p332) target = $region64
        $region63: #{tpu_custom_call.1} parent=59 // pred_region
          %335 = dma.done [#allocation3], 12288
        $region64: #{tpu_custom_call.1} parent=59 // pred_fallthru
          _
        %p336 = scmp.lt.s32.totalorder %s25, 1
        %s337 = scalar_select %p336, %s25, 1
        %s338 = smul.addr %s337, 3
        %s339 = smul.addr %s338, 8
        %s340 = scalar_lea.vmem %s0, %s339
        %p341 = pneg %p46
        %p342 = pneg %p43
        %p343 = pneg %p67
        %p344 = pneg %p64
        %p345 = pneg %p88
        %p346 = pneg %p85
        %p347 = pneg %p109
        %p348 = pneg %p106
        %p349 = pneg %p130
        %p350 = pneg %p127
        %p351 = pneg %p151
        %p352 = pneg %p148
        %p353 = pneg %p172
        %p354 = pneg %p169
        %p355 = pneg %p193
        %p356 = pneg %p190
        %p357 = pneg %p214
        %p358 = pneg %p211
        %p359 = pneg %p235
        %p360 = pneg %p232
        %p361 = pneg %p261
        %p362 = pneg %p258
        %s363 = sand.u32 %s248, 1
        %s364 = scalar_lea.sflag [#allocation4], %s363
        %s365 = sand.u32 %s248, 1
        %s366 = scalar_lea.vmem [#allocation5], %s365
        %p367 = scmp.lt.s32.totalorder %s25, 1
        %s368 = scalar_select %p367, %s25, 1
        %s369 = smul.addr %s368, 3
        %s370 = smul.addr %s369, 8
        %s371 = scalar_lea.vmem %s0, %s370
        %v372 = vld [vmem:[%s371] sm:$0xff]
        %v373 = vld [vmem:[%s371 + $0x8] sm:$0xff]
        %v374 = vld [vmem:[%s371 + $0x10] sm:$0x3]
        %vm378 = vcmask 1046528
        %v379 = vrot.slane %v372, 1
        %v380 = vrot.slane %v373, 1
        %v381 = vsel %vm378, %v379, %v380
        %v382 = vrot.slane %v374, 1
        %v383 = vsel %vm378, %v380, %v382
        %vm386 = vcmask 1045504
        %v387 = vrot.slane %v372, 2
        %v388 = vrot.slane %v373, 2
        %v389 = vsel %vm386, %v387, %v388
        %v390 = vrot.slane %v374, 2
        %v391 = vsel %vm386, %v388, %v390
        %v394 = vld [vmem:[#allocation2] sm:$0xff]
        %v395 = vld [vmem:[#allocation2 + $0x8] sm:$0xff]
        %v396 = vld [vmem:[#allocation2 + $0x10] sm:$0xff]
        %v397 = vld [vmem:[#allocation2 + $0x18] sm:$0xff]
        %v398 = vld [vmem:[#allocation2 + $0x20] sm:$0xff]
        %v399 = vld [vmem:[#allocation2 + $0x28] sm:$0xff]
        %v400 = vld [vmem:[#allocation2 + $0x30] sm:$0xff]
        %v401 = vld [vmem:[#allocation2 + $0x38] sm:$0xff]
        %v402 = vld [vmem:[#allocation2 + $0x40] sm:$0xff]
        %v403 = vld [vmem:[#allocation2 + $0x48] sm:$0xff]
        %v404 = vld [vmem:[#allocation2 + $0x50] sm:$0xff]
        %v405 = vld [vmem:[#allocation2 + $0x58] sm:$0xff]
        %v406 = vld [vmem:[#allocation2 + $0x60] sm:$0xff]
        %v407 = vld [vmem:[#allocation2 + $0x68] sm:$0xff]
        %v408 = vld [vmem:[#allocation2 + $0x70] sm:$0xff]
        %v409 = vld [vmem:[#allocation2 + $0x78] sm:$0xff]
        %v410 = vld [vmem:[#allocation2 + $0x80] sm:$0xff]
        %v411 = vld [vmem:[#allocation2 + $0x88] sm:$0xff]
        %v412 = vld [vmem:[#allocation2 + $0x90] sm:$0xff]
        %v413 = vld [vmem:[#allocation2 + $0x98] sm:$0xff]
        %v414 = vld [vmem:[#allocation2 + $0xa0] sm:$0xff]
        %v415 = vld [vmem:[#allocation2 + $0xa8] sm:$0xff]
        %v416 = vld [vmem:[#allocation2 + $0xb0] sm:$0xff]
        %v417 = vld [vmem:[#allocation2 + $0xb8] sm:$0xff]
        %v418 = vld [vmem:[#allocation2 + $0xc0] sm:$0xff]
        %v419 = vld [vmem:[#allocation2 + $0xc8] sm:$0xff]
        %v420 = vld [vmem:[#allocation2 + $0xd0] sm:$0xff]
        %v421 = vld [vmem:[#allocation2 + $0xd8] sm:$0xff]
        %v422 = vld [vmem:[#allocation2 + $0xe0] sm:$0xff]
        %v423 = vld [vmem:[#allocation2 + $0xe8] sm:$0xff]
        %v424 = vld [vmem:[#allocation2 + $0xf0] sm:$0xff]
        %v425 = vld [vmem:[#allocation2 + $0xf8] sm:$0xff]
        %v426 = vld [vmem:[#allocation2 + $0x100] sm:$0xff]
        %v427 = vld [vmem:[#allocation2 + $0x108] sm:$0xff]
        %v428 = vld [vmem:[#allocation2 + $0x110] sm:$0xff]
        %v429 = vld [vmem:[#allocation2 + $0x118] sm:$0xff]
        %v430 = vld [vmem:[#allocation2 + $0x120] sm:$0xff]
        %v431 = vld [vmem:[#allocation2 + $0x128] sm:$0xff]
        %v432 = vld [vmem:[#allocation2 + $0x130] sm:$0xff]
        %v433 = vld [vmem:[#allocation2 + $0x138] sm:$0xff]
        %v434 = vld [vmem:[#allocation2 + $0x140] sm:$0xff]
        %v435 = vld [vmem:[#allocation2 + $0x148] sm:$0xff]
        %v436 = vld [vmem:[#allocation2 + $0x150] sm:$0xff]
        %v437 = vld [vmem:[#allocation2 + $0x158] sm:$0xff]
        %v438 = vld [vmem:[#allocation2 + $0x160] sm:$0xff]
        %v439 = vld [vmem:[#allocation2 + $0x168] sm:$0xff]
        %v440 = vld [vmem:[#allocation2 + $0x170] sm:$0xff]
        %v441 = vld [vmem:[#allocation2 + $0x178] sm:$0xff]
        %v442 = vld [vmem:[#allocation2 + $0x180] sm:$0xff]
        %v443 = vld [vmem:[#allocation2 + $0x188] sm:$0xff]
        %v444 = vld [vmem:[#allocation2 + $0x190] sm:$0xff]
        %v445 = vld [vmem:[#allocation2 + $0x198] sm:$0xff]
        %v446 = vld [vmem:[#allocation2 + $0x1a0] sm:$0xff]
        %v447 = vld [vmem:[#allocation2 + $0x1a8] sm:$0xff]
        %v448 = vld [vmem:[#allocation2 + $0x1b0] sm:$0xff]
        %v449 = vld [vmem:[#allocation2 + $0x1b8] sm:$0xff]
        %v450 = vld [vmem:[#allocation2 + $0x1c0] sm:$0xff]
        %v451 = vld [vmem:[#allocation2 + $0x1c8] sm:$0xff]
        %v452 = vld [vmem:[#allocation2 + $0x1d0] sm:$0xff]
        %v453 = vld [vmem:[#allocation2 + $0x1d8] sm:$0xff]
        %v454 = vld [vmem:[#allocation2 + $0x1e0] sm:$0xff]
        %v455 = vld [vmem:[#allocation2 + $0x1e8] sm:$0xff]
        %v456 = vld [vmem:[#allocation2 + $0x1f0] sm:$0xff]
        %v457 = vld [vmem:[#allocation2 + $0x1f8] sm:$0xff]
        %v458 = vld [vmem:[#allocation2 + $0x200] sm:$0xff]
        %v459 = vld [vmem:[#allocation2 + $0x208] sm:$0xff]
        %v460 = vld [vmem:[#allocation2 + $0x210] sm:$0xff]
        %v461 = vld [vmem:[#allocation2 + $0x218] sm:$0xff]
        %v462 = vld [vmem:[#allocation2 + $0x220] sm:$0xff]
        %v463 = vld [vmem:[#allocation2 + $0x228] sm:$0xff]
        %v464 = vld [vmem:[#allocation2 + $0x230] sm:$0xff]
        %v465 = vld [vmem:[#allocation2 + $0x238] sm:$0xff]
        %v466 = vld [vmem:[#allocation2 + $0x240] sm:$0xff]
        %v467 = vld [vmem:[#allocation2 + $0x248] sm:$0xff]
        %v468 = vld [vmem:[#allocation2 + $0x250] sm:$0xff]
        %v469 = vld [vmem:[#allocation2 + $0x258] sm:$0xff]
        %v470 = vld [vmem:[#allocation2 + $0x260] sm:$0xff]
        %v471 = vld [vmem:[#allocation2 + $0x268] sm:$0xff]
        %v472 = vld [vmem:[#allocation2 + $0x270] sm:$0xff]
        %v473 = vld [vmem:[#allocation2 + $0x278] sm:$0xff]
        %v474 = vld [vmem:[#allocation2 + $0x280] sm:$0xff]
        %v475 = vld [vmem:[#allocation2 + $0x288] sm:$0xff]
        %v476 = vld [vmem:[#allocation2 + $0x290] sm:$0xff]
        %v477 = vld [vmem:[#allocation2 + $0x298] sm:$0xff]
        %v478 = vld [vmem:[#allocation2 + $0x2a0] sm:$0xff]
        %v479 = vld [vmem:[#allocation2 + $0x2a8] sm:$0xff]
        %v480 = vld [vmem:[#allocation2 + $0x2b0] sm:$0xff]
        %v481 = vld [vmem:[#allocation2 + $0x2b8] sm:$0xff]
        %v482 = vld [vmem:[#allocation2 + $0x2c0] sm:$0xff]
        %v483 = vld [vmem:[#allocation2 + $0x2c8] sm:$0xff]
        %v484 = vld [vmem:[#allocation2 + $0x2d0] sm:$0xff]
        %v485 = vld [vmem:[#allocation2 + $0x2d8] sm:$0xff]
        %v486 = vld [vmem:[#allocation2 + $0x2e0] sm:$0xff]
        %v487 = vld [vmem:[#allocation2 + $0x2e8] sm:$0xff]
        %v488 = vld [vmem:[#allocation2 + $0x2f0] sm:$0xff]
        %v489 = vld [vmem:[#allocation2 + $0x2f8] sm:$0xff]
        %v490 = vld [vmem:[%s2] sm:$0x3]
        %v492 = vlaneseq
        %v493 = vshrl.u32 %v492, 7
        %v494 = vsub.s32 0, %v493
        %v495 = vrot.slane %v490, %v494
        %v496 = vlaneseq
        %v497 = vshrl.u32 %v496, 7
        %v498 = vsub.s32 1, %v497
        %v499 = vrot.slane %v490, %v498
        %502 = vmatprep.subr.mxu0 %v395
        %503 = vmatpush1.msra.mxu0 %v394
        %504 = vmatprep.subr.mxu0 %v397
        %505 = vmatpush1.msra.mxu0 %v396
        %506 = vmatprep.subr.mxu0 %v399
        %507 = vmatpush1.msra.mxu0 %v398
        %508 = vmatprep.subr.mxu0 %v401
        %509 = vmatpush1.msra.mxu0 %v400
        %510 = vmatprep.subr.mxu0 %v403
        %511 = vmatpush1.msra.mxu0 %v402
        %512 = vmatprep.subr.mxu0 %v405
        %513 = vmatpush1.msra.mxu0 %v404
        %514 = vmatprep.subr.mxu0 %v407
        %515 = vmatpush1.msra.mxu0 %v406
        %516 = vmatprep.subr.mxu0 %v409
        %517 = vmatpush1.msra.mxu0 %v408
        %518 = vmatprep.subr.mxu0 %v411
        %519 = vmatpush1.msra.mxu0 %v410
        %520 = vmatprep.subr.mxu0 %v413
        %521 = vmatpush1.msra.mxu0 %v412
        %522 = vmatprep.subr.mxu0 %v415
        %523 = vmatpush1.msra.mxu0 %v414
        %524 = vmatprep.subr.mxu0 %v417
        %525 = vmatpush1.msra.mxu0 %v416
        %526 = vmatprep.subr.mxu0 %v419
        %527 = vmatpush1.msra.mxu0 %v418
        %528 = vmatprep.subr.mxu0 %v421
        %529 = vmatpush1.msra.mxu0 %v420
        %530 = vmatprep.subr.mxu0 %v423
        %531 = vmatpush1.msra.mxu0 %v422
        %532 = vmatprep.subr.mxu0 %v425
        %533 = vmatpush1.msra.mxu0 %v424
        %534 = vmatprep.subr.mxu0 %v427
        %535 = vmatpush1.msra.mxu0 %v426
        %536 = vmatprep.subr.mxu0 %v429
        %537 = vmatpush1.msra.mxu0 %v428
        %538 = vmatprep.subr.mxu0 %v431
        %539 = vmatpush1.msra.mxu0 %v430
        %540 = vmatprep.subr.mxu0 %v433
        %541 = vmatpush1.msra.mxu0 %v432
        %542 = vmatprep.subr.mxu0 %v435
        %543 = vmatpush1.msra.mxu0 %v434
        %544 = vmatprep.subr.mxu0 %v437
        %545 = vmatpush1.msra.mxu0 %v436
        %546 = vmatprep.subr.mxu0 %v439
        %547 = vmatpush1.msra.mxu0 %v438
        %548 = vmatprep.subr.mxu0 %v441
        %549 = vmatpush1.msra.mxu0 %v440
        %550 = vmatprep.subr.mxu0 %v443
        %551 = vmatpush1.msra.mxu0 %v442
        %552 = vmatprep.subr.mxu0 %v445
        %553 = vmatpush1.msra.mxu0 %v444
        %554 = vmatprep.subr.mxu0 %v447
        %555 = vmatpush1.msra.mxu0 %v446
        %556 = vmatprep.subr.mxu0 %v449
        %557 = vmatpush1.msra.mxu0 %v448
        %558 = vmatprep.subr.mxu0 %v451
        %559 = vmatpush1.msra.mxu0 %v450
        %560 = vmatprep.subr.mxu0 %v453
        %561 = vmatpush1.msra.mxu0 %v452
        %562 = vmatprep.subr.mxu0 %v455
        %563 = vmatpush1.msra.mxu0 %v454
        %564 = vmatprep.subr.mxu0 %v457
        %565 = vmatpush1.msra.mxu0 %v456
        %566 = vmatprep.mubr.f32.mxu0 %v381
        %567 = vmatmul.mubr.f32.gmra.mrb[0].mxu0 %v372
        %v568 = vpop.f32.mrb[0].mxu0
        %v569 = vadd.f32 %v495, %v568
        %v570 = vpop.f32.mrb[0].mxu0
        %v571 = vadd.f32 %v499, %v570
        %572 = vmatprep.mubr.f32.mxu0 %v383
        %573 = vmatmul.mubr.f32.gmra.mrb[0].mxu0 %v373
        %v574 = vpop.f32.mrb[0].mxu0
        %v575 = vadd.f32 %v495, %v574
        %v576 = vpop.f32.mrb[0].mxu0
        %v577 = vadd.f32 %v499, %v576
        %578 = vdwg.mxu0
        %579 = vmatprep.subr.mxu0 %v459
        %580 = vmatpush1.msra.mxu0 %v458
        %581 = vmatprep.subr.mxu0 %v461
        %582 = vmatpush1.msra.mxu0 %v460
        %583 = vmatprep.subr.mxu0 %v463
        %584 = vmatpush1.msra.mxu0 %v462
        %585 = vmatprep.subr.mxu0 %v465
        %586 = vmatpush1.msra.mxu0 %v464
        %587 = vmatprep.subr.mxu0 %v467
        %588 = vmatpush1.msra.mxu0 %v466
        %589 = vmatprep.subr.mxu0 %v469
        %590 = vmatpush1.msra.mxu0 %v468
        %591 = vmatprep.subr.mxu0 %v471
        %592 = vmatpush1.msra.mxu0 %v470
        %593 = vmatprep.subr.mxu0 %v473
        %594 = vmatpush1.msra.mxu0 %v472
        %595 = vmatprep.subr.mxu0 %v475
        %596 = vmatpush1.msra.mxu0 %v474
        %597 = vmatprep.subr.mxu0 %v477
        %598 = vmatpush1.msra.mxu0 %v476
        %599 = vmatprep.subr.mxu0 %v479
        %600 = vmatpush1.msra.mxu0 %v478
        %601 = vmatprep.subr.mxu0 %v481
        %602 = vmatpush1.msra.mxu0 %v480
        %603 = vmatprep.subr.mxu0 %v483
        %604 = vmatpush1.msra.mxu0 %v482
        %605 = vmatprep.subr.mxu0 %v485
        %606 = vmatpush1.msra.mxu0 %v484
        %607 = vmatprep.subr.mxu0 %v487
        %608 = vmatpush1.msra.mxu0 %v486
        %609 = vmatprep.subr.mxu0 %v489
        %610 = vmatpush1.msra.mxu0 %v488
        %611 = vmatprep.subr.mxu0 0.0
        %612 = vmatpush1.msra.mxu0 0.0
        %613 = vmatprep.subr.mxu0 0.0
        %614 = vmatpush1.msra.mxu0 0.0
        %615 = vmatprep.subr.mxu0 0.0
        %616 = vmatpush1.msra.mxu0 0.0
        %617 = vmatprep.subr.mxu0 0.0
        %618 = vmatpush1.msra.mxu0 0.0
        %619 = vmatprep.subr.mxu0 0.0
        %620 = vmatpush1.msra.mxu0 0.0
        %621 = vmatprep.subr.mxu0 0.0
        %622 = vmatpush1.msra.mxu0 0.0
        %623 = vmatprep.subr.mxu0 0.0
        %624 = vmatpush1.msra.mxu0 0.0
        %625 = vmatprep.subr.mxu0 0.0
        %626 = vmatpush1.msra.mxu0 0.0
        %627 = vmatprep.subr.mxu0 0.0
        %628 = vmatpush1.msra.mxu0 0.0
        %629 = vmatprep.subr.mxu0 0.0
        %630 = vmatpush1.msra.mxu0 0.0
        %631 = vmatprep.subr.mxu0 0.0
        %632 = vmatpush1.msra.mxu0 0.0
        %633 = vmatprep.subr.mxu0 0.0
        %634 = vmatpush1.msra.mxu0 0.0
        %635 = vmatprep.subr.mxu0 0.0
        %636 = vmatpush1.msra.mxu0 0.0
        %637 = vmatprep.subr.mxu0 0.0
        %638 = vmatpush1.msra.mxu0 0.0
        %639 = vmatprep.subr.mxu0 0.0
        %640 = vmatpush1.msra.mxu0 0.0
        %641 = vmatprep.subr.mxu0 0.0
        %642 = vmatpush1.msra.mxu0 0.0
        %643 = vmatprep.mubr.f32.mxu0 0.0
        %644 = vmatmul.mubr.f32.gmra.mrb[0].mxu0 %v389
        %v645 = vpop.f32.mrb[0].mxu0
        %v646 = vadd.f32 %v569, %v645
        %v647 = vpop.f32.mrb[0].mxu0
        %v648 = vadd.f32 %v571, %v647
        %649 = vmatprep.mubr.f32.mxu0 0.0
        %650 = vmatmul.mubr.f32.gmra.mrb[0].mxu0 %v391
        %v651 = vpop.f32.mrb[0].mxu0
        %v652 = vadd.f32 %v575, %v651
        %v653 = vpop.f32.mrb[0].mxu0
        %v654 = vadd.f32 %v577, %v653
        %655 = vdwg.mxu0
        %v656 = vmax.f32 %v646, 0.0
        %v657 = vmax.f32 %v648, 0.0
        %v658 = vmax.f32 %v652, 0.0
        %v659 = vmax.f32 %v654, 0.0
        %v660 = vadd.f32 %v656, %v658
        %v661 = vrot.slane %v660, 4
        %v662 = vadd.f32 %v660, %v661
        %v663 = vrot.slane %v662, 2
        %v664 = vadd.f32 %v662, %v663
        %v665 = vrot.slane %v664, 1
        %v666 = vadd.f32 %v664, %v665
        %v667 = vadd.f32 %v657, %v659
        %v668 = vrot.slane %v667, 4
        %v669 = vadd.f32 %v667, %v668
        %v670 = vrot.slane %v669, 2
        %v671 = vadd.f32 %v669, %v670
        %v672 = vrot.slane %v671, 1
        %v673 = vadd.f32 %v671, %v672
        %v674 = vadd.f32 %v666, 0.0
        %v675 = vadd.f32 %v673, 0.0
        %v676 = vadd.f32 %v381, %v383
        %v677 = vrot.slane %v676, 4
        %v678 = vadd.f32 %v676, %v677
        %v679 = vrot.slane %v678, 2
        %v680 = vadd.f32 %v678, %v679
        %v681 = vrot.slane %v680, 1
        %v682 = vadd.f32 %v680, %v681
        %v683 = vadd.f32 %v682, 0.0
        %v684 = vmul.f32 %v674, 0.00390625
        %v685 = vmul.f32 %v675, 0.00390625
        %v686 = vld [vmem:[%s3] sm:$0xff]
        %v687 = vld [vmem:[%s3 + $0x8] sm:$0xff]
        %v688 = vld [vmem:[%s3 + $0x10] sm:$0xff]
        %v689 = vld [vmem:[%s3 + $0x18] sm:$0xff]
        %v690 = vld [vmem:[%s3 + $0x20] sm:$0xff]
        %v691 = vld [vmem:[%s3 + $0x28] sm:$0xff]
        %v692 = vld [vmem:[%s3 + $0x30] sm:$0xff]
        %v693 = vld [vmem:[%s3 + $0x38] sm:$0xff]
        %v694 = vld [vmem:[%s3 + $0x40] sm:$0xff]
        %v695 = vld [vmem:[%s3 + $0x48] sm:$0xff]
        %v696 = vld [vmem:[%s3 + $0x50] sm:$0xff]
        %v697 = vld [vmem:[%s3 + $0x58] sm:$0xff]
        %v698 = vld [vmem:[%s3 + $0x60] sm:$0xff]
        %v699 = vld [vmem:[%s3 + $0x68] sm:$0xff]
        %v700 = vld [vmem:[%s3 + $0x70] sm:$0xff]
        %v701 = vld [vmem:[%s3 + $0x78] sm:$0xff]
        %v702 = vld [vmem:[%s3 + $0x80] sm:$0xff]
        %v703 = vld [vmem:[%s3 + $0x88] sm:$0xff]
        %v704 = vld [vmem:[%s3 + $0x90] sm:$0xff]
        %v705 = vld [vmem:[%s3 + $0x98] sm:$0xff]
        %v706 = vld [vmem:[%s3 + $0xa0] sm:$0xff]
        %v707 = vld [vmem:[%s3 + $0xa8] sm:$0xff]
        %v708 = vld [vmem:[%s3 + $0xb0] sm:$0xff]
        %v709 = vld [vmem:[%s3 + $0xb8] sm:$0xff]
        %v710 = vld [vmem:[%s3 + $0xc0] sm:$0xff]
        %v711 = vld [vmem:[%s3 + $0xc8] sm:$0xff]
        %v712 = vld [vmem:[%s3 + $0xd0] sm:$0xff]
        %v713 = vld [vmem:[%s3 + $0xd8] sm:$0xff]
        %v714 = vld [vmem:[%s3 + $0xe0] sm:$0xff]
        %v715 = vld [vmem:[%s3 + $0xe8] sm:$0xff]
        %v716 = vld [vmem:[%s3 + $0xf0] sm:$0xff]
        %v717 = vld [vmem:[%s3 + $0xf8] sm:$0xff]
        %v718 = vld [vmem:[%s4] sm:$0x1]
        %719 = vmatprep.subr.mxu0 0.0
        %720 = vmatpush1.msra.mxu0 %v686
        %721 = vmatprep.subr.mxu0 0.0
        %722 = vmatpush1.msra.mxu0 %v687
        %723 = vmatprep.subr.mxu0 0.0
        %724 = vmatpush1.msra.mxu0 %v688
        %725 = vmatprep.subr.mxu0 0.0
        %726 = vmatpush1.msra.mxu0 %v689
        %727 = vmatprep.subr.mxu0 0.0
        %728 = vmatpush1.msra.mxu0 %v690
        %729 = vmatprep.subr.mxu0 0.0
        %730 = vmatpush1.msra.mxu0 %v691
        %731 = vmatprep.subr.mxu0 0.0
        %732 = vmatpush1.msra.mxu0 %v692
        %733 = vmatprep.subr.mxu0 0.0
        %734 = vmatpush1.msra.mxu0 %v693
        %735 = vmatprep.subr.mxu0 0.0
        %736 = vmatpush1.msra.mxu0 %v694
        %737 = vmatprep.subr.mxu0 0.0
        %738 = vmatpush1.msra.mxu0 %v695
        %739 = vmatprep.subr.mxu0 0.0
        %740 = vmatpush1.msra.mxu0 %v696
        %741 = vmatprep.subr.mxu0 0.0
        %742 = vmatpush1.msra.mxu0 %v697
        %743 = vmatprep.subr.mxu0 0.0
        %744 = vmatpush1.msra.mxu0 %v698
        %745 = vmatprep.subr.mxu0 0.0
        %746 = vmatpush1.msra.mxu0 %v699
        %747 = vmatprep.subr.mxu0 0.0
        %748 = vmatpush1.msra.mxu0 %v700
        %749 = vmatprep.subr.mxu0 0.0
        %750 = vmatpush1.msra.mxu0 %v701
        %751 = vmatprep.subr.mxu0 0.0
        %752 = vmatpush1.msra.mxu0 %v702
        %753 = vmatprep.subr.mxu0 0.0
        %754 = vmatpush1.msra.mxu0 %v703
        %755 = vmatprep.subr.mxu0 0.0
        %756 = vmatpush1.msra.mxu0 %v704
        %757 = vmatprep.subr.mxu0 0.0
        %758 = vmatpush1.msra.mxu0 %v705
        %759 = vmatprep.subr.mxu0 0.0
        %760 = vmatpush1.msra.mxu0 %v706
        %761 = vmatprep.subr.mxu0 0.0
        %762 = vmatpush1.msra.mxu0 %v707
        %763 = vmatprep.subr.mxu0 0.0
        %764 = vmatpush1.msra.mxu0 %v708
        %765 = vmatprep.subr.mxu0 0.0
        %766 = vmatpush1.msra.mxu0 %v709
        %767 = vmatprep.subr.mxu0 0.0
        %768 = vmatpush1.msra.mxu0 %v710
        %769 = vmatprep.subr.mxu0 0.0
        %770 = vmatpush1.msra.mxu0 %v711
        %771 = vmatprep.subr.mxu0 0.0
        %772 = vmatpush1.msra.mxu0 %v712
        %773 = vmatprep.subr.mxu0 0.0
        %774 = vmatpush1.msra.mxu0 %v713
        %775 = vmatprep.subr.mxu0 0.0
        %776 = vmatpush1.msra.mxu0 %v714
        %777 = vmatprep.subr.mxu0 0.0
        %778 = vmatpush1.msra.mxu0 %v715
        %779 = vmatprep.subr.mxu0 0.0
        %780 = vmatpush1.msra.mxu0 %v716
        %781 = vmatprep.subr.mxu0 0.0
        %782 = vmatpush1.msra.mxu0 %v717
        %783 = vmatprep.mubr.f32.mxu0 %v685
        %784 = vmatmul.mubr.f32.gmra.mrb[0].mxu0 %v684
        %v785 = vpop.f32.mrb[0].mxu0
        %v786 = vadd.f32 %v718, %v785
        %v787 = vpop.f32.mrb[0].mxu0
        %788 = vdwg.mxu0
        %v789 = vmul.f32 %v683, 0.00390625
        %v790 = vld [vmem:[%s5] sm:$0xff]
        %v791 = vld [vmem:[%s5 + $0x8] sm:$0xff]
        %v792 = vld [vmem:[%s5 + $0x10] sm:$0xff]
        %v793 = vld [vmem:[%s5 + $0x18] sm:$0xff]
        %v794 = vld [vmem:[%s5 + $0x20] sm:$0xff]
        %v795 = vld [vmem:[%s5 + $0x28] sm:$0xff]
        %v796 = vld [vmem:[%s5 + $0x30] sm:$0xff]
        %v797 = vld [vmem:[%s5 + $0x38] sm:$0xff]
        %v798 = vld [vmem:[%s5 + $0x40] sm:$0xff]
        %v799 = vld [vmem:[%s5 + $0x48] sm:$0xff]
        %v800 = vld [vmem:[%s5 + $0x50] sm:$0xff]
        %v801 = vld [vmem:[%s5 + $0x58] sm:$0xff]
        %v802 = vld [vmem:[%s5 + $0x60] sm:$0xff]
        %v803 = vld [vmem:[%s5 + $0x68] sm:$0xff]
        %v804 = vld [vmem:[%s5 + $0x70] sm:$0xff]
        %v805 = vld [vmem:[%s5 + $0x78] sm:$0xff]
        %v806 = vld [vmem:[%s6] sm:$0x1]
        %807 = vmatprep.subr.mxu0 0.0
        %808 = vmatpush1.msra.mxu0 %v790
        %809 = vmatprep.subr.mxu0 0.0
        %810 = vmatpush1.msra.mxu0 %v791
        %811 = vmatprep.subr.mxu0 0.0
        %812 = vmatpush1.msra.mxu0 %v792
        %813 = vmatprep.subr.mxu0 0.0
        %814 = vmatpush1.msra.mxu0 %v793
        %815 = vmatprep.subr.mxu0 0.0
        %816 = vmatpush1.msra.mxu0 %v794
        %817 = vmatprep.subr.mxu0 0.0
        %818 = vmatpush1.msra.mxu0 %v795
        %819 = vmatprep.subr.mxu0 0.0
        %820 = vmatpush1.msra.mxu0 %v796
        %821 = vmatprep.subr.mxu0 0.0
        %822 = vmatpush1.msra.mxu0 %v797
        %823 = vmatprep.subr.mxu0 0.0
        %824 = vmatpush1.msra.mxu0 %v798
        %825 = vmatprep.subr.mxu0 0.0
        %826 = vmatpush1.msra.mxu0 %v799
        %827 = vmatprep.subr.mxu0 0.0
        %828 = vmatpush1.msra.mxu0 %v800
        %829 = vmatprep.subr.mxu0 0.0
        %830 = vmatpush1.msra.mxu0 %v801
        %831 = vmatprep.subr.mxu0 0.0
        %832 = vmatpush1.msra.mxu0 %v802
        %833 = vmatprep.subr.mxu0 0.0
        %834 = vmatpush1.msra.mxu0 %v803
        %835 = vmatprep.subr.mxu0 0.0
        %836 = vmatpush1.msra.mxu0 %v804
        %837 = vmatprep.subr.mxu0 0.0
        %838 = vmatpush1.msra.mxu0 %v805
        %839 = vmatprep.subr.mxu0 0.0
        %840 = vmatpush1.msra.mxu0 0.0
        %841 = vmatprep.subr.mxu0 0.0
        %842 = vmatpush1.msra.mxu0 0.0
        %843 = vmatprep.subr.mxu0 0.0
        %844 = vmatpush1.msra.mxu0 0.0
        %845 = vmatprep.subr.mxu0 0.0
        %846 = vmatpush1.msra.mxu0 0.0
        %847 = vmatprep.subr.mxu0 0.0
        %848 = vmatpush1.msra.mxu0 0.0
        %849 = vmatprep.subr.mxu0 0.0
        %850 = vmatpush1.msra.mxu0 0.0
        %851 = vmatprep.subr.mxu0 0.0
        %852 = vmatpush1.msra.mxu0 0.0
        %853 = vmatprep.subr.mxu0 0.0
        %854 = vmatpush1.msra.mxu0 0.0
        %855 = vmatprep.subr.mxu0 0.0
        %856 = vmatpush1.msra.mxu0 0.0
        %857 = vmatprep.subr.mxu0 0.0
        %858 = vmatpush1.msra.mxu0 0.0
        %859 = vmatprep.subr.mxu0 0.0
        %860 = vmatpush1.msra.mxu0 0.0
        %861 = vmatprep.subr.mxu0 0.0
        %862 = vmatpush1.msra.mxu0 0.0
        %863 = vmatprep.subr.mxu0 0.0
        %864 = vmatpush1.msra.mxu0 0.0
        %865 = vmatprep.subr.mxu0 0.0
        %866 = vmatpush1.msra.mxu0 0.0
        %867 = vmatprep.subr.mxu0 0.0
        %868 = vmatpush1.msra.mxu0 0.0
        %869 = vmatprep.subr.mxu0 0.0
        %870 = vmatpush1.msra.mxu0 0.0
        %871 = vmatprep.mubr.f32.mxu0 0.0
        %872 = vmatmul.mubr.f32.gmra.mrb[0].mxu0 %v789
        %v873 = vpop.f32.mrb[0].mxu0
        %v874 = vadd.f32 %v806, %v873
        %v875 = vpop.f32.mrb[0].mxu0
        %876 = vdwg.mxu0
        %v877 = vld [vmem:[%s7] sm:$0xff]
        %v878 = vld [vmem:[%s7 + $0x8] sm:$0xff]
        %v879 = vld [vmem:[%s7 + $0x10] sm:$0xff]
        %v880 = vld [vmem:[%s8] sm:$0xff]
        %vm881 = vcmask 64512
        %v883 = vsel %vm881, %v874, 0
        %885 = vmatprep.subr.mxu0 0.0
        %886 = vmatpush1.msra.mxu0 %v880
        %887 = vmatprep.subr.mxu0 0.0
        %888 = vmatpush1.msra.mxu0 0.0
        %889 = vmatprep.subr.mxu0 0.0
        %890 = vmatpush1.msra.mxu0 0.0
        %891 = vmatprep.subr.mxu0 0.0
        %892 = vmatpush1.msra.mxu0 0.0
        %893 = vmatprep.subr.mxu0 0.0
        %894 = vmatpush1.msra.mxu0 0.0
        %895 = vmatprep.subr.mxu0 0.0
        %896 = vmatpush1.msra.mxu0 0.0
        %897 = vmatprep.subr.mxu0 0.0
        %898 = vmatpush1.msra.mxu0 0.0
        %899 = vmatprep.subr.mxu0 0.0
        %900 = vmatpush1.msra.mxu0 0.0
        %901 = vmatprep.subr.mxu0 0.0
        %902 = vmatpush1.msra.mxu0 0.0
        %903 = vmatprep.subr.mxu0 0.0
        %904 = vmatpush1.msra.mxu0 0.0
        %905 = vmatprep.subr.mxu0 0.0
        %906 = vmatpush1.msra.mxu0 0.0
        %907 = vmatprep.subr.mxu0 0.0
        %908 = vmatpush1.msra.mxu0 0.0
        %909 = vmatprep.subr.mxu0 0.0
        %910 = vmatpush1.msra.mxu0 0.0
        %911 = vmatprep.subr.mxu0 0.0
        %912 = vmatpush1.msra.mxu0 0.0
        %913 = vmatprep.subr.mxu0 0.0
        %914 = vmatpush1.msra.mxu0 0.0
        %915 = vmatprep.subr.mxu0 0.0
        %916 = vmatpush1.msra.mxu0 0.0
        %917 = vmatprep.subr.mxu0 0.0
        %918 = vmatpush1.msra.mxu0 0.0
        %919 = vmatprep.subr.mxu0 0.0
        %920 = vmatpush1.msra.mxu0 0.0
        %921 = vmatprep.subr.mxu0 0.0
        %922 = vmatpush1.msra.mxu0 0.0
        %923 = vmatprep.subr.mxu0 0.0
        %924 = vmatpush1.msra.mxu0 0.0
        %925 = vmatprep.subr.mxu0 0.0
        %926 = vmatpush1.msra.mxu0 0.0
        %927 = vmatprep.subr.mxu0 0.0
        %928 = vmatpush1.msra.mxu0 0.0
        %929 = vmatprep.subr.mxu0 0.0
        %930 = vmatpush1.msra.mxu0 0.0
        %931 = vmatprep.subr.mxu0 0.0
        %932 = vmatpush1.msra.mxu0 0.0
        %933 = vmatprep.subr.mxu0 0.0
        %934 = vmatpush1.msra.mxu0 0.0
        %935 = vmatprep.subr.mxu0 0.0
        %936 = vmatpush1.msra.mxu0 0.0
        %937 = vmatprep.subr.mxu0 0.0
        %938 = vmatpush1.msra.mxu0 0.0
        %939 = vmatprep.subr.mxu0 0.0
        %940 = vmatpush1.msra.mxu0 0.0
        %941 = vmatprep.subr.mxu0 0.0
        %942 = vmatpush1.msra.mxu0 0.0
        %943 = vmatprep.subr.mxu0 0.0
        %944 = vmatpush1.msra.mxu0 0.0
        %945 = vmatprep.subr.mxu0 0.0
        %946 = vmatpush1.msra.mxu0 0.0
        %947 = vmatprep.subr.mxu0 0.0
        %948 = vmatpush1.msra.mxu0 0.0
        %949 = vmatprep.mubr.f32.mxu0 0.0
        %950 = vmatmul.mubr.f32.gmra.mrb[0].mxu0 %v883
        %v951 = vpop.f32.mrb[0].mxu0
        %v952 = vadd.f32 0.0, %v951
        %v953 = vpop.f32.mrb[0].mxu0
        %954 = vdwg.mxu0
        %vm955 = vcmask 195584
        %v957 = vsel %vm955, %v786, 0
        %959 = vmatprep.subr.mxu0 0.0
        %960 = vmatpush1.msra.mxu0 %v877
        %961 = vmatprep.subr.mxu0 0.0
        %962 = vmatpush1.msra.mxu0 %v878
        %963 = vmatprep.subr.mxu0 0.0
        %964 = vmatpush1.msra.mxu0 %v879
        %965 = vmatprep.subr.mxu0 0.0
        %966 = vmatpush1.msra.mxu0 0.0
        %967 = vmatprep.subr.mxu0 0.0
        %968 = vmatpush1.msra.mxu0 0.0
        %969 = vmatprep.subr.mxu0 0.0
        %970 = vmatpush1.msra.mxu0 0.0
        %971 = vmatprep.subr.mxu0 0.0
        %972 = vmatpush1.msra.mxu0 0.0
        %973 = vmatprep.subr.mxu0 0.0
        %974 = vmatpush1.msra.mxu0 0.0
        %975 = vmatprep.subr.mxu0 0.0
        %976 = vmatpush1.msra.mxu0 0.0
        %977 = vmatprep.subr.mxu0 0.0
        %978 = vmatpush1.msra.mxu0 0.0
        %979 = vmatprep.subr.mxu0 0.0
        %980 = vmatpush1.msra.mxu0 0.0
        %981 = vmatprep.subr.mxu0 0.0
        %982 = vmatpush1.msra.mxu0 0.0
        %983 = vmatprep.subr.mxu0 0.0
        %984 = vmatpush1.msra.mxu0 0.0
        %985 = vmatprep.subr.mxu0 0.0
        %986 = vmatpush1.msra.mxu0 0.0
        %987 = vmatprep.subr.mxu0 0.0
        %988 = vmatpush1.msra.mxu0 0.0
        %989 = vmatprep.subr.mxu0 0.0
        %990 = vmatpush1.msra.mxu0 0.0
        %991 = vmatprep.subr.mxu0 0.0
        %992 = vmatpush1.msra.mxu0 0.0
        %993 = vmatprep.subr.mxu0 0.0
        %994 = vmatpush1.msra.mxu0 0.0
        %995 = vmatprep.subr.mxu0 0.0
        %996 = vmatpush1.msra.mxu0 0.0
        %997 = vmatprep.subr.mxu0 0.0
        %998 = vmatpush1.msra.mxu0 0.0
        %999 = vmatprep.subr.mxu0 0.0
        %1000 = vmatpush1.msra.mxu0 0.0
        %1001 = vmatprep.subr.mxu0 0.0
        %1002 = vmatpush1.msra.mxu0 0.0
        %1003 = vmatprep.subr.mxu0 0.0
        %1004 = vmatpush1.msra.mxu0 0.0
        %1005 = vmatprep.subr.mxu0 0.0
        %1006 = vmatpush1.msra.mxu0 0.0
        %1007 = vmatprep.subr.mxu0 0.0
        %1008 = vmatpush1.msra.mxu0 0.0
        %1009 = vmatprep.subr.mxu0 0.0
        %1010 = vmatpush1.msra.mxu0 0.0
        %1011 = vmatprep.subr.mxu0 0.0
        %1012 = vmatpush1.msra.mxu0 0.0
        %1013 = vmatprep.subr.mxu0 0.0
        %1014 = vmatpush1.msra.mxu0 0.0
        %1015 = vmatprep.subr.mxu0 0.0
        %1016 = vmatpush1.msra.mxu0 0.0
        %1017 = vmatprep.subr.mxu0 0.0
        %1018 = vmatpush1.msra.mxu0 0.0
        %1019 = vmatprep.subr.mxu0 0.0
        %1020 = vmatpush1.msra.mxu0 0.0
        %1021 = vmatprep.subr.mxu0 0.0
        %1022 = vmatpush1.msra.mxu0 0.0
        %1023 = vmatprep.mubr.f32.mxu0 0.0
        %1024 = vmatmul.mubr.f32.gmra.mrb[0].mxu0 %v957
        %v1025 = vpop.f32.mrb[0].mxu0
        %v1026 = vadd.f32 %v952, %v1025
        %v1027 = vpop.f32.mrb[0].mxu0
        %1028 = vdwg.mxu0
        %v1029 = vld [vmem:[%s9] sm:$0x1]
        %v1030 = vadd.f32 %v1026, %v1029
        %1031 = vst [vmem:[%s366] sm:$0x1] %v1030
        %s1032 = sand.u32 %s248, 1
        %s1033 = scalar_lea.sflag [#allocation4], %s1032
        %s1034 = sand.u32 %s248, 1
        %s1035 = scalar_lea.vmem [#allocation5], %s1034
        // Predicated region
        $region65: #{tpu_custom_call.1} parent=59 // pred_check
          %p1036 = pneg %p258
        $region66: #{tpu_custom_call.1} parent=59 // pred_check_branch
          %1038 = sbr.rel (%p1036) target = $region68
        $region67: #{tpu_custom_call.1} parent=59 // pred_region
          %s1040 = ssub.s32 16, 16
          %1041 = vsyncadd %s1033, %s1040
          %s1042 = smul.addr %s25, 16
          %s1043 = scalar_lea.hbm %s10, %s1042
          %s1045 = sshll.u32 %s1035, 4
          %s1046 = int_to_ptr.vmem [resolvable:$true] %s1045
          %1048 = dma.vmem_to_hbm [thread:$0]  %s1046, 16, %s1043, %s1033
        $region68: #{tpu_custom_call.1} parent=59 // pred_fallthru
          _
      $region60: #{tpu_custom_call.1} parent=5 // pred_fallthru
        _
      %p1049 = scmp.le.s32.totalorder 2, %s20
      // Predicated region
      $region69: #{tpu_custom_call.1} parent=5 // pred_check
        %p1050 = pneg %p1049
      $region70: #{tpu_custom_call.1} parent=5 // pred_check_branch
        %1052 = sbr.rel (%p1050) target = $region72
      $region71: #{tpu_custom_call.1} parent=5 // pred_region
        %s1053 = ssub.s32 %s20, 2
        // Predicated region
        $region73: #{tpu_custom_call.1} parent=71 // pred_check
          %p1054 = pneg %p264
        $region74: #{tpu_custom_call.1} parent=71 // pred_check_branch
          %1056 = sbr.rel (%p1054) target = $region76
        $region75: #{tpu_custom_call.1} parent=71 // pred_region
          %s1057 = sand.u32 %s249, 1
          %s1058 = scalar_lea.sflag [#allocation4], %s1057
          %s1059 = sand.u32 %s249, 1
          %s1060 = scalar_lea.vmem [#allocation5], %s1059
          %1061 = dma.done %s1058, 16
        $region76: #{tpu_custom_call.1} parent=71 // pred_fallthru
          _
      $region72: #{tpu_custom_call.1} parent=5 // pred_fallthru
        _
    $region6: #{tpu_custom_call.1} parent=1 // loop_footer
      %s24 = sadd.s32 1, %s20
    $region7: #{tpu_custom_call.1} parent=1 // loop_footer_branch
      %19 = sbr.rel target = $region3
    $region8: #{tpu_custom_call.1} parent=1 // loop_exit
      _
    %1062 = vsyncpa [#allocation3], 1
    %s1063 = scalar_lea.sflag [#allocation3], 1
    %1064 = vsyncpa %s1063, 1
    %1065 = vsyncpa [#allocation4], 1
    %s1066 = scalar_lea.sflag [#allocation4], 1
    %1067 = vsyncpa %s1066, 1

// kernel: tpu_custom_call.1
$region0: #{tpu_custom_call.1}
  #allocation0 [shape = 'u32[]', space=smem, size = 0x4, offset = 0x4, fixed_abs, tag = 'smem constant byte address 0x4 - core index']
  #allocation1 [shape = 'u32[144,128]{1,0:T(1,128)}', space=vmem, size = 0x12000, scoped, tag = 'internal scratch']
  %s0 = inlined_call_operand.vmem [shape: f32[2,18,128], index: 0, kind: input, shape index: {}]
  %s1 = inlined_call_operand.hbm [shape: f32[384,256], index: 1, kind: input, shape index: {}]
  %s2 = inlined_call_operand.vmem [shape: f32[1,256], index: 2, kind: input, shape index: {}]
  %s3 = inlined_call_operand.vmem [shape: f32[256,24], index: 3, kind: input, shape index: {}]
  %s4 = inlined_call_operand.vmem [shape: f32[1,24], index: 4, kind: input, shape index: {}]
  %s5 = inlined_call_operand.vmem [shape: f32[128,8], index: 5, kind: input, shape index: {}]
  %s6 = inlined_call_operand.vmem [shape: f32[1,8], index: 6, kind: input, shape index: {}]
  %s7 = inlined_call_operand.vmem [shape: f32[24,128], index: 7, kind: input, shape index: {}]
  %s8 = inlined_call_operand.vmem [shape: f32[8,128], index: 8, kind: input, shape index: {}]
  %s9 = inlined_call_operand.vmem [shape: f32[1,128], index: 9, kind: input, shape index: {}]
  %s10 = inlined_call_operand.hbm [shape: f32[2,1,128], index: 10, kind: output, shape index: {}]
  %s11 = sld [smem:[#allocation0]]
  $region77: #{tpu_custom_call.1} parent=0
    _
  %s13 = ssub.s32 1, %s11
  %s14 = scalar_select 0, %s13, %s11
  $region1: #{tpu_custom_call.1} parent=0
    #allocation2 [shape = 'u8[393216]{0}', space=vmem, size = 0x60000, scoped, tag = 'input window, operand 1, single buffered']
    #allocation3 [shape = 's32[2]{0}', space=sflag, size = 0x8, scoped, tag = 'scoped memory for tpu_custom_call.1']
    #allocation4 [shape = 's32[2]{0}', space=sflag, size = 0x8, scoped, tag = 'scoped memory for tpu_custom_call.1']
    #allocation5 [shape = 'u8[1024]{0}', space=vmem, size = 0x400, scoped, tag = 'output window, operand 0']
    %15 = vsyncpa [#allocation3], 0
    %16 = vsyncpa [#allocation4], 0
    %s17 = scalar_lea.sflag [#allocation4], 1
    %18 = vsyncpa %s17, 0
    loop: start=0, step=1, limit=4
    $region2: #{tpu_custom_call.1} parent=1 // loop_pre_header
      _
    $region3: #{tpu_custom_call.1} parent=1 // loop_header
      %s20 = sphi 0, %s24
      %p21 = scmp.ge.s32.totalorder %s20, 4
      %s30 = sphi 0, %s32
      %s33 = sphi 0, %s30
      %s34 = sphi 0, %s33
      %s50 = sphi 0, %s34
      %s54 = sphi 0, %s54
      %s56 = sphi 0, %s54
      %s57 = sphi 0, %s56
      %s71 = sphi 0, %s57
      %s75 = sphi 0, %s75
      %s77 = sphi 0, %s75
      %s78 = sphi 0, %s77
      %s92 = sphi 0, %s78
      %s96 = sphi 0, %s96
      %s98 = sphi 0, %s96
      %s99 = sphi 0, %s98
      %s113 = sphi 0, %s99
      %s117 = sphi 0, %s117
      %s119 = sphi 0, %s117
      %s120 = sphi 0, %s119
      %s134 = sphi 0, %s120
      %s138 = sphi 0, %s138
      %s140 = sphi 0, %s138
      %s141 = sphi 0, %s140
      %s155 = sphi 0, %s141
      %s159 = sphi 0, %s159
      %s161 = sphi 0, %s159
      %s162 = sphi 0, %s161
      %s176 = sphi 0, %s162
      %s180 = sphi 0, %s180
      %s182 = sphi 0, %s180
      %s183 = sphi 0, %s182
      %s197 = sphi 0, %s183
      %s201 = sphi 0, %s201
      %s203 = sphi 0, %s201
      %s204 = sphi 0, %s203
      %s218 = sphi 0, %s204
      %s222 = sphi 0, %s222
      %s224 = sphi 0, %s222
      %s225 = sphi 0, %s224
      %s239 = sphi 0, %s225
      %s245 = sphi 0, %s247
      %s248 = sphi 0, %s245
      %s249 = sphi 0, %s248
      %s265 = sphi 0, %s249
    $region4: #{tpu_custom_call.1} parent=1 // loop_header_branch
      %23 = sbr.rel (%p21) target = $region8
    $region5: #{tpu_custom_call.1} parent=1 // loop_body
      %s25 = ssub.s32 %s20, 1
      %s26 = ssub.s32 %s20, 2
      %s27 = sadd.s32 %s20, 1
      %s28 = ssub.s32 %s20, %s27
      %p29 = scmp.eq.s32.totalorder %s28, 0
      %s31 = sadd.s32 %s30, 1
      %s32 = scalar_select %p29, %s30, %s31
      %p35 = pneg %p29
      %p36 = scmp.eq.s32.totalorder %s20, 1
      %p37 = por %p35, %p36
      %p38 = scmp.ne.s32.totalorder %s30, %s33
      %p39 = scmp.eq.s32.totalorder %s20, 0
      %p40 = por %p38, %p39
      %p41 = scmp.ne.s32.totalorder %s30, %s33
      %p42 = scmp.eq.s32.totalorder %s25, 1
      %p43 = por %p41, %p42
      %p44 = scmp.ne.s32.totalorder %s33, %s34
      %p45 = scmp.eq.s32.totalorder %s25, 0
      %p46 = por %p44, %p45
      %p47 = scmp.ne.s32.totalorder %s33, %s34
      %p48 = scmp.eq.s32.totalorder %s26, 1
      %p49 = por %p47, %p48
      %p51 = scmp.ne.s32.totalorder %s34, %s50
      %p52 = scmp.eq.s32.totalorder %s26, 0
      %p53 = por %p51, %p52
      %s55 = sadd.s32 %s54, 1
      %p58 = scmp.eq.s32.totalorder %s20, 1
      %p59 = scmp.ne.s32.totalorder %s54, %s56
      %p60 = scmp.eq.s32.totalorder %s20, 0
      %p61 = por %p59, %p60
      %p62 = scmp.ne.s32.totalorder %s54, %s56
      %p63 = scmp.eq.s32.totalorder %s25, 1
      %p64 = por %p62, %p63
      %p65 = scmp.ne.s32.totalorder %s56, %s57
      %p66 = scmp.eq.s32.totalorder %s25, 0
      %p67 = por %p65, %p66
      %p68 = scmp.ne.s32.totalorder %s56, %s57
      %p69 = scmp.eq.s32.totalorder %s26, 1
      %p70 = por %p68, %p69
      %p72 = scmp.ne.s32.totalorder %s57, %s71
      %p73 = scmp.eq.s32.totalorder %s26, 0
      %p74 = por %p72, %p73
      %s76 = sadd.s32 %s75, 1
      %p79 = scmp.eq.s32.totalorder %s20, 1
      %p80 = scmp.ne.s32.totalorder %s75, %s77
      %p81 = scmp.eq.s32.totalorder %s20, 0
      %p82 = por %p80, %p81
      %p83 = scmp.ne.s32.totalorder %s75, %s77
      %p84 = scmp.eq.s32.totalorder %s25, 1
      %p85 = por %p83, %p84
      %p86 = scmp.ne.s32.totalorder %s77, %s78
      %p87 = scmp.eq.s32.totalorder %s25, 0
      %p88 = por %p86, %p87
      %p89 = scmp.ne.s32.totalorder %s77, %s78
      %p90 = scmp.eq.s32.totalorder %s26, 1
      %p91 = por %p89, %p90
      %p93 = scmp.ne.s32.totalorder %s78, %s92
      %p94 = scmp.eq.s32.totalorder %s26, 0
      %p95 = por %p93, %p94
      %s97 = sadd.s32 %s96, 1
      %p100 = scmp.eq.s32.totalorder %s20, 1
      %p101 = scmp.ne.s32.totalorder %s96, %s98
      %p102 = scmp.eq.s32.totalorder %s20, 0
      %p103 = por %p101, %p102
      %p104 = scmp.ne.s32.totalorder %s96, %s98
      %p105 = scmp.eq.s32.totalorder %s25, 1
      %p106 = por %p104, %p105
      %p107 = scmp.ne.s32.totalorder %s98, %s99
      %p108 = scmp.eq.s32.totalorder %s25, 0
      %p109 = por %p107, %p108
      %p110 = scmp.ne.s32.totalorder %s98, %s99
      %p111 = scmp.eq.s32.totalorder %s26, 1
      %p112 = por %p110, %p111
      %p114 = scmp.ne.s32.totalorder %s99, %s113
      %p115 = scmp.eq.s32.totalorder %s26, 0
      %p116 = por %p114, %p115
      %s118 = sadd.s32 %s117, 1
      %p121 = scmp.eq.s32.totalorder %s20, 1
      %p122 = scmp.ne.s32.totalorder %s117, %s119
      %p123 = scmp.eq.s32.totalorder %s20, 0
      %p124 = por %p122, %p123
      %p125 = scmp.ne.s32.totalorder %s117, %s119
      %p126 = scmp.eq.s32.totalorder %s25, 1
      %p127 = por %p125, %p126
      %p128 = scmp.ne.s32.totalorder %s119, %s120
      %p129 = scmp.eq.s32.totalorder %s25, 0
      %p130 = por %p128, %p129
      %p131 = scmp.ne.s32.totalorder %s119, %s120
      %p132 = scmp.eq.s32.totalorder %s26, 1
      %p133 = por %p131, %p132
      %p135 = scmp.ne.s32.totalorder %s120, %s134
      %p136 = scmp.eq.s32.totalorder %s26, 0
      %p137 = por %p135, %p136
      %s139 = sadd.s32 %s138, 1
      %p142 = scmp.eq.s32.totalorder %s20, 1
      %p143 = scmp.ne.s32.totalorder %s138, %s140
      %p144 = scmp.eq.s32.totalorder %s20, 0
      %p145 = por %p143, %p144
      %p146 = scmp.ne.s32.totalorder %s138, %s140
      %p147 = scmp.eq.s32.totalorder %s25, 1
      %p148 = por %p146, %p147
      %p149 = scmp.ne.s32.totalorder %s140, %s141
      %p150 = scmp.eq.s32.totalorder %s25, 0
      %p151 = por %p149, %p150
      %p152 = scmp.ne.s32.totalorder %s140, %s141
      %p153 = scmp.eq.s32.totalorder %s26, 1
      %p154 = por %p152, %p153
      %p156 = scmp.ne.s32.totalorder %s141, %s155
      %p157 = scmp.eq.s32.totalorder %s26, 0
      %p158 = por %p156, %p157
      %s160 = sadd.s32 %s159, 1
      %p163 = scmp.eq.s32.totalorder %s20, 1
      %p164 = scmp.ne.s32.totalorder %s159, %s161
      %p165 = scmp.eq.s32.totalorder %s20, 0
      %p166 = por %p164, %p165
      %p167 = scmp.ne.s32.totalorder %s159, %s161
      %p168 = scmp.eq.s32.totalorder %s25, 1
      %p169 = por %p167, %p168
      %p170 = scmp.ne.s32.totalorder %s161, %s162
      %p171 = scmp.eq.s32.totalorder %s25, 0
      %p172 = por %p170, %p171
      %p173 = scmp.ne.s32.totalorder %s161, %s162
      %p174 = scmp.eq.s32.totalorder %s26, 1
      %p175 = por %p173, %p174
      %p177 = scmp.ne.s32.totalorder %s162, %s176
      %p178 = scmp.eq.s32.totalorder %s26, 0
      %p179 = por %p177, %p178
      %s181 = sadd.s32 %s180, 1
      %p184 = scmp.eq.s32.totalorder %s20, 1
      %p185 = scmp.ne.s32.totalorder %s180, %s182
      %p186 = scmp.eq.s32.totalorder %s20, 0
      %p187 = por %p185, %p186
      %p188 = scmp.ne.s32.totalorder %s180, %s182
      %p189 = scmp.eq.s32.totalorder %s25, 1
      %p190 = por %p188, %p189
      %p191 = scmp.ne.s32.totalorder %s182, %s183
      %p192 = scmp.eq.s32.totalorder %s25, 0
      %p193 = por %p191, %p192
      %p194 = scmp.ne.s32.totalorder %s182, %s183
      %p195 = scmp.eq.s32.totalorder %s26, 1
      %p196 = por %p194, %p195
      %p198 = scmp.ne.s32.totalorder %s183, %s197
      %p199 = scmp.eq.s32.totalorder %s26, 0
      %p200 = por %p198, %p199
      %s202 = sadd.s32 %s201, 1
      %p205 = scmp.eq.s32.totalorder %s20, 1
      %p206 = scmp.ne.s32.totalorder %s201, %s203
      %p207 = scmp.eq.s32.totalorder %s20, 0
      %p208 = por %p206, %p207
      %p209 = scmp.ne.s32.totalorder %s201, %s203
      %p210 = scmp.eq.s32.totalorder %s25, 1
      %p211 = por %p209, %p210
      %p212 = scmp.ne.s32.totalorder %s203, %s204
      %p213 = scmp.eq.s32.totalorder %s25, 0
      %p214 = por %p212, %p213
      %p215 = scmp.ne.s32.totalorder %s203, %s204
      %p216 = scmp.eq.s32.totalorder %s26, 1
      %p217 = por %p215, %p216
      %p219 = scmp.ne.s32.totalorder %s204, %s218
      %p220 = scmp.eq.s32.totalorder %s26, 0
      %p221 = por %p219, %p220
      %s223 = sadd.s32 %s222, 1
      %p226 = scmp.eq.s32.totalorder %s20, 1
      %p227 = scmp.ne.s32.totalorder %s222, %s224
      %p228 = scmp.eq.s32.totalorder %s20, 0
      %p229 = por %p227, %p228
      %p230 = scmp.ne.s32.totalorder %s222, %s224
      %p231 = scmp.eq.s32.totalorder %s25, 1
      %p232 = por %p230, %p231
      %p233 = scmp.ne.s32.totalorder %s224, %s225
      %p234 = scmp.eq.s32.totalorder %s25, 0
      %p235 = por %p233, %p234
      %p236 = scmp.ne.s32.totalorder %s224, %s225
      %p237 = scmp.eq.s32.totalorder %s26, 1
      %p238 = por %p236, %p237
      %p240 = scmp.ne.s32.totalorder %s225, %s239
      %p241 = scmp.eq.s32.totalorder %s26, 0
      %p242 = por %p240, %p241
      %s243 = ssub.s32 %s20, %s27
      %p244 = scmp.eq.s32.totalorder %s243, 0
      %s246 = sadd.s32 %s245, 1
      %s247 = scalar_select %p244, %s245, %s246
      %p250 = pneg %p244
      %p251 = scmp.eq.s32.totalorder %s20, 1
      %p252 = por %p250, %p251
      %p253 = scmp.ne.s32.totalorder %s245, %s248
      %p254 = scmp.eq.s32.totalorder %s20, 0
      %p255 = por %p253, %p254
      %p256 = scmp.ne.s32.totalorder %s245, %s248
      %p257 = scmp.eq.s32.totalorder %s25, 1
      %p258 = por %p256, %p257
      %p259 = scmp.ne.s32.totalorder %s248, %s249
      %p260 = scmp.eq.s32.totalorder %s25, 0
      %p261 = por %p259, %p260
      %p262 = scmp.ne.s32.totalorder %s248, %s249
      %p263 = scmp.eq.s32.totalorder %s26, 1
      %p264 = por %p262, %p263
      %p266 = scmp.ne.s32.totalorder %s249, %s265
      %p267 = scmp.eq.s32.totalorder %s26, 0
      %p268 = por %p266, %p267
      %p269 = scmp.le.s32.totalorder 1, %s20
      %p270 = scmp.lt.s32.totalorder %s20, 3
      %p271 = pnand %p269, %p270
      %p272 = pneg %p271
      // Predicated region
      $region9: #{tpu_custom_call.1} parent=5 // pred_check
        _
      $region10: #{tpu_custom_call.1} parent=5 // pred_check_branch
        %274 = sbr.rel (%p271) target = $region12
      $region11: #{tpu_custom_call.1} parent=5 // pred_region
        %s275 = ssub.s32 %s20, 1
        // Predicated region
        $region13: #{tpu_custom_call.1} parent=11 // pred_check
          %p276 = pneg %p67
        $region14: #{tpu_custom_call.1} parent=11 // pred_check_branch
          %278 = sbr.rel (%p276) target = $region16
        $region15: #{tpu_custom_call.1} parent=11 // pred_region
          %s280 = ssub.s32 12288, 12288
          %281 = vsyncadd [#allocation3], %s280
          %s282 = sshll.u32 [#allocation2], 4
          %s283 = int_to_ptr.vmem [resolvable:$true] %s282
          %288 = dma.hbm_to_vmem [thread:$0]  %s1, 12288, %s283, [#allocation3], 256, 256, 16
        $region16: #{tpu_custom_call.1} parent=11 // pred_fallthru
          _
        // Predicated region
        $region17: #{tpu_custom_call.1} parent=11 // pred_check
          %p289 = pneg %p88
        $region18: #{tpu_custom_call.1} parent=11 // pred_check_branch
          %291 = sbr.rel (%p289) target = $region20
        $region19: #{tpu_custom_call.1} parent=11 // pred_region
          _
        $region20: #{tpu_custom_call.1} parent=11 // pred_fallthru
          _
        // Predicated region
        $region21: #{tpu_custom_call.1} parent=11 // pred_check
          %p292 = pneg %p109
        $region22: #{tpu_custom_call.1} parent=11 // pred_check_branch
          %294 = sbr.rel (%p292) target = $region24
        $region23: #{tpu_custom_call.1} parent=11 // pred_region
          _
        $region24: #{tpu_custom_call.1} parent=11 // pred_fallthru
          _
        // Predicated region
        $region25: #{tpu_custom_call.1} parent=11 // pred_check
          %p295 = pneg %p130
        $region26: #{tpu_custom_call.1} parent=11 // pred_check_branch
          %297 = sbr.rel (%p295) target = $region28
        $region27: #{tpu_custom_call.1} parent=11 // pred_region
          _
        $region28: #{tpu_custom_call.1} parent=11 // pred_fallthru
          _
        // Predicated region
        $region29: #{tpu_custom_call.1} parent=11 // pred_check
          %p298 = pneg %p151
        $region30: #{tpu_custom_call.1} parent=11 // pred_check_branch
          %300 = sbr.rel (%p298) target = $region32
        $region31: #{tpu_custom_call.1} parent=11 // pred_region
          _
        $region32: #{tpu_custom_call.1} parent=11 // pred_fallthru
          _
        // Predicated region
        $region33: #{tpu_custom_call.1} parent=11 // pred_check
          %p301 = pneg %p172
        $region34: #{tpu_custom_call.1} parent=11 // pred_check_branch
          %303 = sbr.rel (%p301) target = $region36
        $region35: #{tpu_custom_call.1} parent=11 // pred_region
          _
        $region36: #{tpu_custom_call.1} parent=11 // pred_fallthru
          _
        // Predicated region
        $region37: #{tpu_custom_call.1} parent=11 // pred_check
          %p304 = pneg %p193
        $region38: #{tpu_custom_call.1} parent=11 // pred_check_branch
          %306 = sbr.rel (%p304) target = $region40
        $region39: #{tpu_custom_call.1} parent=11 // pred_region
          _
        $region40: #{tpu_custom_call.1} parent=11 // pred_fallthru
          _
        // Predicated region
        $region41: #{tpu_custom_call.1} parent=11 // pred_check
          %p307 = pneg %p214
        $region42: #{tpu_custom_call.1} parent=11 // pred_check_branch
          %309 = sbr.rel (%p307) target = $region44
        $region43: #{tpu_custom_call.1} parent=11 // pred_region
          _
        $region44: #{tpu_custom_call.1} parent=11 // pred_fallthru
          _
        // Predicated region
        $region45: #{tpu_custom_call.1} parent=11 // pred_check
          %p310 = pneg %p235
        $region46: #{tpu_custom_call.1} parent=11 // pred_check_branch
          %312 = sbr.rel (%p310) target = $region48
        $region47: #{tpu_custom_call.1} parent=11 // pred_region
          _
        $region48: #{tpu_custom_call.1} parent=11 // pred_fallthru
          _
      $region12: #{tpu_custom_call.1} parent=5 // pred_fallthru
        _
      %p313 = scmp.lt.s32.totalorder %s20, 2
      // Predicated region
      $region49: #{tpu_custom_call.1} parent=5 // pred_check
        %p314 = pneg %p313
      $region50: #{tpu_custom_call.1} parent=5 // pred_check_branch
        %316 = sbr.rel (%p314) target = $region52
      $region51: #{tpu_custom_call.1} parent=5 // pred_region
        // Predicated region
        $region53: #{tpu_custom_call.1} parent=51 // pred_check
          %p317 = pneg %p40
        $region54: #{tpu_custom_call.1} parent=51 // pred_check_branch
          %319 = sbr.rel (%p317) target = $region56
        $region55: #{tpu_custom_call.1} parent=51 // pred_region
          %p320 = scmp.lt.s32.totalorder %s20, 1
          %s321 = scalar_select %p320, %s20, 1
          %s322 = smul.addr %s321, 3
          %s323 = smul.addr %s322, 8
          %s324 = scalar_lea.vmem %s0, %s323
        $region56: #{tpu_custom_call.1} parent=51 // pred_fallthru
          _
      $region52: #{tpu_custom_call.1} parent=5 // pred_fallthru
        _
      %p325 = scmp.le.s32.totalorder 1, %s20
      %p326 = scmp.lt.s32.totalorder %s20, 3
      %p327 = pnand %p325, %p326
      %p328 = pneg %p327
      // Predicated region
      $region57: #{tpu_custom_call.1} parent=5 // pred_check
        _
      $region58: #{tpu_custom_call.1} parent=5 // pred_check_branch
        %330 = sbr.rel (%p327) target = $region60
      $region59: #{tpu_custom_call.1} parent=5 // pred_region
        %s331 = ssub.s32 %s20, 1
        // Predicated region
        $region61: #{tpu_custom_call.1} parent=59 // pred_check
          %p332 = pneg %p67
        $region62: #{tpu_custom_call.1} parent=59 // pred_check_branch
          %334 = sbr.rel (%p332) target = $region64
        $region63: #{tpu_custom_call.1} parent=59 // pred_region
          %335 = dma.done [#allocation3], 12288
        $region64: #{tpu_custom_call.1} parent=59 // pred_fallthru
          _
        %p336 = scmp.lt.s32.totalorder %s25, 1
        %s337 = scalar_select %p336, %s25, 1
        %s338 = smul.addr %s337, 3
        %s339 = smul.addr %s338, 8
        %s340 = scalar_lea.vmem %s0, %s339
        %p341 = pneg %p46
        %p342 = pneg %p43
        %p343 = pneg %p67
        %p344 = pneg %p64
        %p345 = pneg %p88
        %p346 = pneg %p85
        %p347 = pneg %p109
        %p348 = pneg %p106
        %p349 = pneg %p130
        %p350 = pneg %p127
        %p351 = pneg %p151
        %p352 = pneg %p148
        %p353 = pneg %p172
        %p354 = pneg %p169
        %p355 = pneg %p193
        %p356 = pneg %p190
        %p357 = pneg %p214
        %p358 = pneg %p211
        %p359 = pneg %p235
        %p360 = pneg %p232
        %p361 = pneg %p261
        %p362 = pneg %p258
        %s363 = sand.u32 %s248, 1
        %s364 = scalar_lea.sflag [#allocation4], %s363
        %s365 = sand.u32 %s248, 1
        %s366 = scalar_lea.vmem [#allocation5], %s365
        %p367 = scmp.lt.s32.totalorder %s25, 1
        %s368 = scalar_select %p367, %s25, 1
        %s369 = smul.addr %s368, 3
        %s370 = smul.addr %s369, 8
        %s371 = scalar_lea.vmem %s0, %s370
        %v372 = vld [vmem:[%s371] sm:$0xff]
        %v373 = vld [vmem:[%s371 + $0x8] sm:$0xff]
        %v374 = vld [vmem:[%s371 + $0x10] sm:$0x3]
        %vm378 = vcmask 1046528
        %v379 = vrot.slane %v372, 1
        %v380 = vrot.slane %v373, 1
        %v381 = vsel %vm378, %v379, %v380
        %v382 = vrot.slane %v374, 1
        %v383 = vsel %vm378, %v380, %v382
        %vm386 = vcmask 1045504
        %v387 = vrot.slane %v372, 2
        %v388 = vrot.slane %v373, 2
        %v389 = vsel %vm386, %v387, %v388
        %v390 = vrot.slane %v374, 2
        %v391 = vsel %vm386, %v388, %v390
        %v394 = vld [vmem:[#allocation2] sm:$0xff]
        %v395 = vld [vmem:[#allocation2 + $0x8] sm:$0xff]
        %v396 = vld [vmem:[#allocation2 + $0x10] sm:$0xff]
        %v397 = vld [vmem:[#allocation2 + $0x18] sm:$0xff]
        %v398 = vld [vmem:[#allocation2 + $0x20] sm:$0xff]
        %v399 = vld [vmem:[#allocation2 + $0x28] sm:$0xff]
        %v400 = vld [vmem:[#allocation2 + $0x30] sm:$0xff]
        %v401 = vld [vmem:[#allocation2 + $0x38] sm:$0xff]
        %v402 = vld [vmem:[#allocation2 + $0x40] sm:$0xff]
        %v403 = vld [vmem:[#allocation2 + $0x48] sm:$0xff]
        %v404 = vld [vmem:[#allocation2 + $0x50] sm:$0xff]
        %v405 = vld [vmem:[#allocation2 + $0x58] sm:$0xff]
        %v406 = vld [vmem:[#allocation2 + $0x60] sm:$0xff]
        %v407 = vld [vmem:[#allocation2 + $0x68] sm:$0xff]
        %v408 = vld [vmem:[#allocation2 + $0x70] sm:$0xff]
        %v409 = vld [vmem:[#allocation2 + $0x78] sm:$0xff]
        %v410 = vld [vmem:[#allocation2 + $0x80] sm:$0xff]
        %v411 = vld [vmem:[#allocation2 + $0x88] sm:$0xff]
        %v412 = vld [vmem:[#allocation2 + $0x90] sm:$0xff]
        %v413 = vld [vmem:[#allocation2 + $0x98] sm:$0xff]
        %v414 = vld [vmem:[#allocation2 + $0xa0] sm:$0xff]
        %v415 = vld [vmem:[#allocation2 + $0xa8] sm:$0xff]
        %v416 = vld [vmem:[#allocation2 + $0xb0] sm:$0xff]
        %v417 = vld [vmem:[#allocation2 + $0xb8] sm:$0xff]
        %v418 = vld [vmem:[#allocation2 + $0xc0] sm:$0xff]
        %v419 = vld [vmem:[#allocation2 + $0xc8] sm:$0xff]
        %v420 = vld [vmem:[#allocation2 + $0xd0] sm:$0xff]
        %v421 = vld [vmem:[#allocation2 + $0xd8] sm:$0xff]
        %v422 = vld [vmem:[#allocation2 + $0xe0] sm:$0xff]
        %v423 = vld [vmem:[#allocation2 + $0xe8] sm:$0xff]
        %v424 = vld [vmem:[#allocation2 + $0xf0] sm:$0xff]
        %v425 = vld [vmem:[#allocation2 + $0xf8] sm:$0xff]
        %v426 = vld [vmem:[#allocation2 + $0x100] sm:$0xff]
        %v427 = vld [vmem:[#allocation2 + $0x108] sm:$0xff]
        %v428 = vld [vmem:[#allocation2 + $0x110] sm:$0xff]
        %v429 = vld [vmem:[#allocation2 + $0x118] sm:$0xff]
        %v430 = vld [vmem:[#allocation2 + $0x120] sm:$0xff]
        %v431 = vld [vmem:[#allocation2 + $0x128] sm:$0xff]
        %v432 = vld [vmem:[#allocation2 + $0x130] sm:$0xff]
        %v433 = vld [vmem:[#allocation2 + $0x138] sm:$0xff]
        %v434 = vld [vmem:[#allocation2 + $0x140] sm:$0xff]
        %v435 = vld [vmem:[#allocation2 + $0x148] sm:$0xff]
        %v436 = vld [vmem:[#allocation2 + $0x150] sm:$0xff]
        %v437 = vld [vmem:[#allocation2 + $0x158] sm:$0xff]
        %v438 = vld [vmem:[#allocation2 + $0x160] sm:$0xff]
        %v439 = vld [vmem:[#allocation2 + $0x168] sm:$0xff]
        %v440 = vld [vmem:[#allocation2 + $0x170] sm:$0xff]
        %v441 = vld [vmem:[#allocation2 + $0x178] sm:$0xff]
        %v442 = vld [vmem:[#allocation2 + $0x180] sm:$0xff]
        %v443 = vld [vmem:[#allocation2 + $0x188] sm:$0xff]
        %v444 = vld [vmem:[#allocation2 + $0x190] sm:$0xff]
        %v445 = vld [vmem:[#allocation2 + $0x198] sm:$0xff]
        %v446 = vld [vmem:[#allocation2 + $0x1a0] sm:$0xff]
        %v447 = vld [vmem:[#allocation2 + $0x1a8] sm:$0xff]
        %v448 = vld [vmem:[#allocation2 + $0x1b0] sm:$0xff]
        %v449 = vld [vmem:[#allocation2 + $0x1b8] sm:$0xff]
        %v450 = vld [vmem:[#allocation2 + $0x1c0] sm:$0xff]
        %v451 = vld [vmem:[#allocation2 + $0x1c8] sm:$0xff]
        %v452 = vld [vmem:[#allocation2 + $0x1d0] sm:$0xff]
        %v453 = vld [vmem:[#allocation2 + $0x1d8] sm:$0xff]
        %v454 = vld [vmem:[#allocation2 + $0x1e0] sm:$0xff]
        %v455 = vld [vmem:[#allocation2 + $0x1e8] sm:$0xff]
        %v456 = vld [vmem:[#allocation2 + $0x1f0] sm:$0xff]
        %v457 = vld [vmem:[#allocation2 + $0x1f8] sm:$0xff]
        %v458 = vld [vmem:[#allocation2 + $0x200] sm:$0xff]
        %v459 = vld [vmem:[#allocation2 + $0x208] sm:$0xff]
        %v460 = vld [vmem:[#allocation2 + $0x210] sm:$0xff]
        %v461 = vld [vmem:[#allocation2 + $0x218] sm:$0xff]
        %v462 = vld [vmem:[#allocation2 + $0x220] sm:$0xff]
        %v463 = vld [vmem:[#allocation2 + $0x228] sm:$0xff]
        %v464 = vld [vmem:[#allocation2 + $0x230] sm:$0xff]
        %v465 = vld [vmem:[#allocation2 + $0x238] sm:$0xff]
        %v466 = vld [vmem:[#allocation2 + $0x240] sm:$0xff]
        %v467 = vld [vmem:[#allocation2 + $0x248] sm:$0xff]
        %v468 = vld [vmem:[#allocation2 + $0x250] sm:$0xff]
        %v469 = vld [vmem:[#allocation2 + $0x258] sm:$0xff]
        %v470 = vld [vmem:[#allocation2 + $0x260] sm:$0xff]
        %v471 = vld [vmem:[#allocation2 + $0x268] sm:$0xff]
        %v472 = vld [vmem:[#allocation2 + $0x270] sm:$0xff]
        %v473 = vld [vmem:[#allocation2 + $0x278] sm:$0xff]
        %v474 = vld [vmem:[#allocation2 + $0x280] sm:$0xff]
        %v475 = vld [vmem:[#allocation2 + $0x288] sm:$0xff]
        %v476 = vld [vmem:[#allocation2 + $0x290] sm:$0xff]
        %v477 = vld [vmem:[#allocation2 + $0x298] sm:$0xff]
        %v478 = vld [vmem:[#allocation2 + $0x2a0] sm:$0xff]
        %v479 = vld [vmem:[#allocation2 + $0x2a8] sm:$0xff]
        %v480 = vld [vmem:[#allocation2 + $0x2b0] sm:$0xff]
        %v481 = vld [vmem:[#allocation2 + $0x2b8] sm:$0xff]
        %v482 = vld [vmem:[#allocation2 + $0x2c0] sm:$0xff]
        %v483 = vld [vmem:[#allocation2 + $0x2c8] sm:$0xff]
        %v484 = vld [vmem:[#allocation2 + $0x2d0] sm:$0xff]
        %v485 = vld [vmem:[#allocation2 + $0x2d8] sm:$0xff]
        %v486 = vld [vmem:[#allocation2 + $0x2e0] sm:$0xff]
        %v487 = vld [vmem:[#allocation2 + $0x2e8] sm:$0xff]
        %v488 = vld [vmem:[#allocation2 + $0x2f0] sm:$0xff]
        %v489 = vld [vmem:[#allocation2 + $0x2f8] sm:$0xff]
        %v490 = vld [vmem:[%s2] sm:$0x3]
        %v492 = vlaneseq
        %v493 = vshrl.u32 %v492, 7
        %v494 = vsub.s32 0, %v493
        %v495 = vrot.slane %v490, %v494
        %v496 = vlaneseq
        %v497 = vshrl.u32 %v496, 7
        %v498 = vsub.s32 1, %v497
        %v499 = vrot.slane %v490, %v498
        %502 = vmatprep.subr.mxu0 %v395
        %503 = vmatpush1.msra.mxu0 %v394
        %504 = vmatprep.subr.mxu0 %v397
        %505 = vmatpush1.msra.mxu0 %v396
        %506 = vmatprep.subr.mxu0 %v399
        %507 = vmatpush1.msra.mxu0 %v398
        %508 = vmatprep.subr.mxu0 %v401
        %509 = vmatpush1.msra.mxu0 %v400
        %510 = vmatprep.subr.mxu0 %v403
        %511 = vmatpush1.msra.mxu0 %v402
        %512 = vmatprep.subr.mxu0 %v405
        %513 = vmatpush1.msra.mxu0 %v404
        %514 = vmatprep.subr.mxu0 %v407
        %515 = vmatpush1.msra.mxu0 %v406
        %516 = vmatprep.subr.mxu0 %v409
        %517 = vmatpush1.msra.mxu0 %v408
        %518 = vmatprep.subr.mxu0 %v411
        %519 = vmatpush1.msra.mxu0 %v410
        %520 = vmatprep.subr.mxu0 %v413
        %521 = vmatpush1.msra.mxu0 %v412
        %522 = vmatprep.subr.mxu0 %v415
        %523 = vmatpush1.msra.mxu0 %v414
        %524 = vmatprep.subr.mxu0 %v417
        %525 = vmatpush1.msra.mxu0 %v416
        %526 = vmatprep.subr.mxu0 %v419
        %527 = vmatpush1.msra.mxu0 %v418
        %528 = vmatprep.subr.mxu0 %v421
        %529 = vmatpush1.msra.mxu0 %v420
        %530 = vmatprep.subr.mxu0 %v423
        %531 = vmatpush1.msra.mxu0 %v422
        %532 = vmatprep.subr.mxu0 %v425
        %533 = vmatpush1.msra.mxu0 %v424
        %534 = vmatprep.subr.mxu0 %v427
        %535 = vmatpush1.msra.mxu0 %v426
        %536 = vmatprep.subr.mxu0 %v429
        %537 = vmatpush1.msra.mxu0 %v428
        %538 = vmatprep.subr.mxu0 %v431
        %539 = vmatpush1.msra.mxu0 %v430
        %540 = vmatprep.subr.mxu0 %v433
        %541 = vmatpush1.msra.mxu0 %v432
        %542 = vmatprep.subr.mxu0 %v435
        %543 = vmatpush1.msra.mxu0 %v434
        %544 = vmatprep.subr.mxu0 %v437
        %545 = vmatpush1.msra.mxu0 %v436
        %546 = vmatprep.subr.mxu0 %v439
        %547 = vmatpush1.msra.mxu0 %v438
        %548 = vmatprep.subr.mxu0 %v441
        %549 = vmatpush1.msra.mxu0 %v440
        %550 = vmatprep.subr.mxu0 %v443
        %551 = vmatpush1.msra.mxu0 %v442
        %552 = vmatprep.subr.mxu0 %v445
        %553 = vmatpush1.msra.mxu0 %v444
        %554 = vmatprep.subr.mxu0 %v447
        %555 = vmatpush1.msra.mxu0 %v446
        %556 = vmatprep.subr.mxu0 %v449
        %557 = vmatpush1.msra.mxu0 %v448
        %558 = vmatprep.subr.mxu0 %v451
        %559 = vmatpush1.msra.mxu0 %v450
        %560 = vmatprep.subr.mxu0 %v453
        %561 = vmatpush1.msra.mxu0 %v452
        %562 = vmatprep.subr.mxu0 %v455
        %563 = vmatpush1.msra.mxu0 %v454
        %564 = vmatprep.subr.mxu0 %v457
        %565 = vmatpush1.msra.mxu0 %v456
        %566 = vmatprep.mubr.f32.mxu0 %v381
        %567 = vmatmul.mubr.f32.gmra.mrb[0].mxu0 %v372
        %v568 = vpop.f32.mrb[0].mxu0
        %v569 = vadd.f32 %v495, %v568
        %v570 = vpop.f32.mrb[0].mxu0
        %v571 = vadd.f32 %v499, %v570
        %572 = vmatprep.mubr.f32.mxu0 %v383
        %573 = vmatmul.mubr.f32.gmra.mrb[0].mxu0 %v373
        %v574 = vpop.f32.mrb[0].mxu0
        %v575 = vadd.f32 %v495, %v574
        %v576 = vpop.f32.mrb[0].mxu0
        %v577 = vadd.f32 %v499, %v576
        %578 = vdwg.mxu0
        %579 = vmatprep.subr.mxu0 %v459
        %580 = vmatpush1.msra.mxu0 %v458
        %581 = vmatprep.subr.mxu0 %v461
        %582 = vmatpush1.msra.mxu0 %v460
        %583 = vmatprep.subr.mxu0 %v463
        %584 = vmatpush1.msra.mxu0 %v462
        %585 = vmatprep.subr.mxu0 %v465
        %586 = vmatpush1.msra.mxu0 %v464
        %587 = vmatprep.subr.mxu0 %v467
        %588 = vmatpush1.msra.mxu0 %v466
        %589 = vmatprep.subr.mxu0 %v469
        %590 = vmatpush1.msra.mxu0 %v468
        %591 = vmatprep.subr.mxu0 %v471
        %592 = vmatpush1.msra.mxu0 %v470
        %593 = vmatprep.subr.mxu0 %v473
        %594 = vmatpush1.msra.mxu0 %v472
        %595 = vmatprep.subr.mxu0 %v475
        %596 = vmatpush1.msra.mxu0 %v474
        %597 = vmatprep.subr.mxu0 %v477
        %598 = vmatpush1.msra.mxu0 %v476
        %599 = vmatprep.subr.mxu0 %v479
        %600 = vmatpush1.msra.mxu0 %v478
        %601 = vmatprep.subr.mxu0 %v481
        %602 = vmatpush1.msra.mxu0 %v480
        %603 = vmatprep.subr.mxu0 %v483
        %604 = vmatpush1.msra.mxu0 %v482
        %605 = vmatprep.subr.mxu0 %v485
        %606 = vmatpush1.msra.mxu0 %v484
        %607 = vmatprep.subr.mxu0 %v487
        %608 = vmatpush1.msra.mxu0 %v486
        %609 = vmatprep.subr.mxu0 %v489
        %610 = vmatpush1.msra.mxu0 %v488
        %611 = vmatprep.subr.mxu0 0.0
        %612 = vmatpush1.msra.mxu0 0.0
        %613 = vmatprep.subr.mxu0 0.0
        %614 = vmatpush1.msra.mxu0 0.0
        %615 = vmatprep.subr.mxu0 0.0
        %616 = vmatpush1.msra.mxu0 0.0
        %617 = vmatprep.subr.mxu0 0.0
        %618 = vmatpush1.msra.mxu0 0.0
        %619 = vmatprep.subr.mxu0 0.0
        %620 = vmatpush1.msra.mxu0 0.0
        %621 = vmatprep.subr.mxu0 0.0
        %622 = vmatpush1.msra.mxu0 0.0
        %623 = vmatprep.subr.mxu0 0.0
        %624 = vmatpush1.msra.mxu0 0.0
        %625 = vmatprep.subr.mxu0 0.0
        %626 = vmatpush1.msra.mxu0 0.0
        %627 = vmatprep.subr.mxu0 0.0
        %628 = vmatpush1.msra.mxu0 0.0
        %629 = vmatprep.subr.mxu0 0.0
        %630 = vmatpush1.msra.mxu0 0.0
        %631 = vmatprep.subr.mxu0 0.0
        %632 = vmatpush1.msra.mxu0 0.0
        %633 = vmatprep.subr.mxu0 0.0
        %634 = vmatpush1.msra.mxu0 0.0
        %635 = vmatprep.subr.mxu0 0.0
        %636 = vmatpush1.msra.mxu0 0.0
        %637 = vmatprep.subr.mxu0 0.0
        %638 = vmatpush1.msra.mxu0 0.0
        %639 = vmatprep.subr.mxu0 0.0
        %640 = vmatpush1.msra.mxu0 0.0
        %641 = vmatprep.subr.mxu0 0.0
        %642 = vmatpush1.msra.mxu0 0.0
        %643 = vmatprep.mubr.f32.mxu0 0.0
        %644 = vmatmul.mubr.f32.gmra.mrb[0].mxu0 %v389
        %v645 = vpop.f32.mrb[0].mxu0
        %v646 = vadd.f32 %v569, %v645
        %v647 = vpop.f32.mrb[0].mxu0
        %v648 = vadd.f32 %v571, %v647
        %649 = vmatprep.mubr.f32.mxu0 0.0
        %650 = vmatmul.mubr.f32.gmra.mrb[0].mxu0 %v391
        %v651 = vpop.f32.mrb[0].mxu0
        %v652 = vadd.f32 %v575, %v651
        %v653 = vpop.f32.mrb[0].mxu0
        %v654 = vadd.f32 %v577, %v653
        %655 = vdwg.mxu0
        %v656 = vmax.f32 %v646, 0.0
        %v657 = vmax.f32 %v648, 0.0
        %v658 = vmax.f32 %v652, 0.0
        %v659 = vmax.f32 %v654, 0.0
        %v660 = vadd.f32 %v656, %v658
        %v661 = vrot.slane %v660, 4
        %v662 = vadd.f32 %v660, %v661
        %v663 = vrot.slane %v662, 2
        %v664 = vadd.f32 %v662, %v663
        %v665 = vrot.slane %v664, 1
        %v666 = vadd.f32 %v664, %v665
        %v667 = vadd.f32 %v657, %v659
        %v668 = vrot.slane %v667, 4
        %v669 = vadd.f32 %v667, %v668
        %v670 = vrot.slane %v669, 2
        %v671 = vadd.f32 %v669, %v670
        %v672 = vrot.slane %v671, 1
        %v673 = vadd.f32 %v671, %v672
        %v674 = vadd.f32 %v666, 0.0
        %v675 = vadd.f32 %v673, 0.0
        %v676 = vadd.f32 %v381, %v383
        %v677 = vrot.slane %v676, 4
        %v678 = vadd.f32 %v676, %v677
        %v679 = vrot.slane %v678, 2
        %v680 = vadd.f32 %v678, %v679
        %v681 = vrot.slane %v680, 1
        %v682 = vadd.f32 %v680, %v681
        %v683 = vadd.f32 %v682, 0.0
        %v684 = vmul.f32 %v674, 0.00390625
        %v685 = vmul.f32 %v675, 0.00390625
        %v686 = vld [vmem:[%s3] sm:$0xff]
        %v687 = vld [vmem:[%s3 + $0x8] sm:$0xff]
        %v688 = vld [vmem:[%s3 + $0x10] sm:$0xff]
        %v689 = vld [vmem:[%s3 + $0x18] sm:$0xff]
        %v690 = vld [vmem:[%s3 + $0x20] sm:$0xff]
        %v691 = vld [vmem:[%s3 + $0x28] sm:$0xff]
        %v692 = vld [vmem:[%s3 + $0x30] sm:$0xff]
        %v693 = vld [vmem:[%s3 + $0x38] sm:$0xff]
        %v694 = vld [vmem:[%s3 + $0x40] sm:$0xff]
        %v695 = vld [vmem:[%s3 + $0x48] sm:$0xff]
        %v696 = vld [vmem:[%s3 + $0x50] sm:$0xff]
        %v697 = vld [vmem:[%s3 + $0x58] sm:$0xff]
        %v698 = vld [vmem:[%s3 + $0x60] sm:$0xff]
        %v699 = vld [vmem:[%s3 + $0x68] sm:$0xff]
        %v700 = vld [vmem:[%s3 + $0x70] sm:$0xff]
        %v701 = vld [vmem:[%s3 + $0x78] sm:$0xff]
        %v702 = vld [vmem:[%s3 + $0x80] sm:$0xff]
        %v703 = vld [vmem:[%s3 + $0x88] sm:$0xff]
        %v704 = vld [vmem:[%s3 + $0x90] sm:$0xff]
        %v705 = vld [vmem:[%s3 + $0x98] sm:$0xff]
        %v706 = vld [vmem:[%s3 + $0xa0] sm:$0xff]
        %v707 = vld [vmem:[%s3 + $0xa8] sm:$0xff]
        %v708 = vld [vmem:[%s3 + $0xb0] sm:$0xff]
        %v709 = vld [vmem:[%s3 + $0xb8] sm:$0xff]
        %v710 = vld [vmem:[%s3 + $0xc0] sm:$0xff]
        %v711 = vld [vmem:[%s3 + $0xc8] sm:$0xff]
        %v712 = vld [vmem:[%s3 + $0xd0] sm:$0xff]
        %v713 = vld [vmem:[%s3 + $0xd8] sm:$0xff]
        %v714 = vld [vmem:[%s3 + $0xe0] sm:$0xff]
        %v715 = vld [vmem:[%s3 + $0xe8] sm:$0xff]
        %v716 = vld [vmem:[%s3 + $0xf0] sm:$0xff]
        %v717 = vld [vmem:[%s3 + $0xf8] sm:$0xff]
        %v718 = vld [vmem:[%s4] sm:$0x1]
        %719 = vmatprep.subr.mxu0 0.0
        %720 = vmatpush1.msra.mxu0 %v686
        %721 = vmatprep.subr.mxu0 0.0
        %722 = vmatpush1.msra.mxu0 %v687
        %723 = vmatprep.subr.mxu0 0.0
        %724 = vmatpush1.msra.mxu0 %v688
        %725 = vmatprep.subr.mxu0 0.0
        %726 = vmatpush1.msra.mxu0 %v689
        %727 = vmatprep.subr.mxu0 0.0
        %728 = vmatpush1.msra.mxu0 %v690
        %729 = vmatprep.subr.mxu0 0.0
        %730 = vmatpush1.msra.mxu0 %v691
        %731 = vmatprep.subr.mxu0 0.0
        %732 = vmatpush1.msra.mxu0 %v692
        %733 = vmatprep.subr.mxu0 0.0
        %734 = vmatpush1.msra.mxu0 %v693
        %735 = vmatprep.subr.mxu0 0.0
        %736 = vmatpush1.msra.mxu0 %v694
        %737 = vmatprep.subr.mxu0 0.0
        %738 = vmatpush1.msra.mxu0 %v695
        %739 = vmatprep.subr.mxu0 0.0
        %740 = vmatpush1.msra.mxu0 %v696
        %741 = vmatprep.subr.mxu0 0.0
        %742 = vmatpush1.msra.mxu0 %v697
        %743 = vmatprep.subr.mxu0 0.0
        %744 = vmatpush1.msra.mxu0 %v698
        %745 = vmatprep.subr.mxu0 0.0
        %746 = vmatpush1.msra.mxu0 %v699
        %747 = vmatprep.subr.mxu0 0.0
        %748 = vmatpush1.msra.mxu0 %v700
        %749 = vmatprep.subr.mxu0 0.0
        %750 = vmatpush1.msra.mxu0 %v701
        %751 = vmatprep.subr.mxu0 0.0
        %752 = vmatpush1.msra.mxu0 %v702
        %753 = vmatprep.subr.mxu0 0.0
        %754 = vmatpush1.msra.mxu0 %v703
        %755 = vmatprep.subr.mxu0 0.0
        %756 = vmatpush1.msra.mxu0 %v704
        %757 = vmatprep.subr.mxu0 0.0
        %758 = vmatpush1.msra.mxu0 %v705
        %759 = vmatprep.subr.mxu0 0.0
        %760 = vmatpush1.msra.mxu0 %v706
        %761 = vmatprep.subr.mxu0 0.0
        %762 = vmatpush1.msra.mxu0 %v707
        %763 = vmatprep.subr.mxu0 0.0
        %764 = vmatpush1.msra.mxu0 %v708
        %765 = vmatprep.subr.mxu0 0.0
        %766 = vmatpush1.msra.mxu0 %v709
        %767 = vmatprep.subr.mxu0 0.0
        %768 = vmatpush1.msra.mxu0 %v710
        %769 = vmatprep.subr.mxu0 0.0
        %770 = vmatpush1.msra.mxu0 %v711
        %771 = vmatprep.subr.mxu0 0.0
        %772 = vmatpush1.msra.mxu0 %v712
        %773 = vmatprep.subr.mxu0 0.0
        %774 = vmatpush1.msra.mxu0 %v713
        %775 = vmatprep.subr.mxu0 0.0
        %776 = vmatpush1.msra.mxu0 %v714
        %777 = vmatprep.subr.mxu0 0.0
        %778 = vmatpush1.msra.mxu0 %v715
        %779 = vmatprep.subr.mxu0 0.0
        %780 = vmatpush1.msra.mxu0 %v716
        %781 = vmatprep.subr.mxu0 0.0
        %782 = vmatpush1.msra.mxu0 %v717
        %783 = vmatprep.mubr.f32.mxu0 %v685
        %784 = vmatmul.mubr.f32.gmra.mrb[0].mxu0 %v684
        %v785 = vpop.f32.mrb[0].mxu0
        %v786 = vadd.f32 %v718, %v785
        %v787 = vpop.f32.mrb[0].mxu0
        %788 = vdwg.mxu0
        %v789 = vmul.f32 %v683, 0.00390625
        %v790 = vld [vmem:[%s5] sm:$0xff]
        %v791 = vld [vmem:[%s5 + $0x8] sm:$0xff]
        %v792 = vld [vmem:[%s5 + $0x10] sm:$0xff]
        %v793 = vld [vmem:[%s5 + $0x18] sm:$0xff]
        %v794 = vld [vmem:[%s5 + $0x20] sm:$0xff]
        %v795 = vld [vmem:[%s5 + $0x28] sm:$0xff]
        %v796 = vld [vmem:[%s5 + $0x30] sm:$0xff]
        %v797 = vld [vmem:[%s5 + $0x38] sm:$0xff]
        %v798 = vld [vmem:[%s5 + $0x40] sm:$0xff]
        %v799 = vld [vmem:[%s5 + $0x48] sm:$0xff]
        %v800 = vld [vmem:[%s5 + $0x50] sm:$0xff]
        %v801 = vld [vmem:[%s5 + $0x58] sm:$0xff]
        %v802 = vld [vmem:[%s5 + $0x60] sm:$0xff]
        %v803 = vld [vmem:[%s5 + $0x68] sm:$0xff]
        %v804 = vld [vmem:[%s5 + $0x70] sm:$0xff]
        %v805 = vld [vmem:[%s5 + $0x78] sm:$0xff]
        %v806 = vld [vmem:[%s6] sm:$0x1]
        %807 = vmatprep.subr.mxu0 0.0
        %808 = vmatpush1.msra.mxu0 %v790
        %809 = vmatprep.subr.mxu0 0.0
        %810 = vmatpush1.msra.mxu0 %v791
        %811 = vmatprep.subr.mxu0 0.0
        %812 = vmatpush1.msra.mxu0 %v792
        %813 = vmatprep.subr.mxu0 0.0
        %814 = vmatpush1.msra.mxu0 %v793
        %815 = vmatprep.subr.mxu0 0.0
        %816 = vmatpush1.msra.mxu0 %v794
        %817 = vmatprep.subr.mxu0 0.0
        %818 = vmatpush1.msra.mxu0 %v795
        %819 = vmatprep.subr.mxu0 0.0
        %820 = vmatpush1.msra.mxu0 %v796
        %821 = vmatprep.subr.mxu0 0.0
        %822 = vmatpush1.msra.mxu0 %v797
        %823 = vmatprep.subr.mxu0 0.0
        %824 = vmatpush1.msra.mxu0 %v798
        %825 = vmatprep.subr.mxu0 0.0
        %826 = vmatpush1.msra.mxu0 %v799
        %827 = vmatprep.subr.mxu0 0.0
        %828 = vmatpush1.msra.mxu0 %v800
        %829 = vmatprep.subr.mxu0 0.0
        %830 = vmatpush1.msra.mxu0 %v801
        %831 = vmatprep.subr.mxu0 0.0
        %832 = vmatpush1.msra.mxu0 %v802
        %833 = vmatprep.subr.mxu0 0.0
        %834 = vmatpush1.msra.mxu0 %v803
        %835 = vmatprep.subr.mxu0 0.0
        %836 = vmatpush1.msra.mxu0 %v804
        %837 = vmatprep.subr.mxu0 0.0
        %838 = vmatpush1.msra.mxu0 %v805
        %839 = vmatprep.subr.mxu0 0.0
        %840 = vmatpush1.msra.mxu0 0.0
        %841 = vmatprep.subr.mxu0 0.0
        %842 = vmatpush1.msra.mxu0 0.0
        %843 = vmatprep.subr.mxu0 0.0
        %844 = vmatpush1.msra.mxu0 0.0
        %845 = vmatprep.subr.mxu0 0.0
        %846 = vmatpush1.msra.mxu0 0.0
        %847 = vmatprep.subr.mxu0 0.0
        %848 = vmatpush1.msra.mxu0 0.0
        %849 = vmatprep.subr.mxu0 0.0
        %850 = vmatpush1.msra.mxu0 0.0
        %851 = vmatprep.subr.mxu0 0.0
        %852 = vmatpush1.msra.mxu0 0.0
        %853 = vmatprep.subr.mxu0 0.0
        %854 = vmatpush1.msra.mxu0 0.0
        %855 = vmatprep.subr.mxu0 0.0
        %856 = vmatpush1.msra.mxu0 0.0
        %857 = vmatprep.subr.mxu0 0.0
        %858 = vmatpush1.msra.mxu0 0.0
        %859 = vmatprep.subr.mxu0 0.0
        %860 = vmatpush1.msra.mxu0 0.0
        %861 = vmatprep.subr.mxu0 0.0
        %862 = vmatpush1.msra.mxu0 0.0
        %863 = vmatprep.subr.mxu0 0.0
        %864 = vmatpush1.msra.mxu0 0.0
        %865 = vmatprep.subr.mxu0 0.0
        %866 = vmatpush1.msra.mxu0 0.0
        %867 = vmatprep.subr.mxu0 0.0
        %868 = vmatpush1.msra.mxu0 0.0
        %869 = vmatprep.subr.mxu0 0.0
        %870 = vmatpush1.msra.mxu0 0.0
        %871 = vmatprep.mubr.f32.mxu0 0.0
        %872 = vmatmul.mubr.f32.gmra.mrb[0].mxu0 %v789
        %v873 = vpop.f32.mrb[0].mxu0
        %v874 = vadd.f32 %v806, %v873
        %v875 = vpop.f32.mrb[0].mxu0
        %876 = vdwg.mxu0
        %v877 = vld [vmem:[%s7] sm:$0xff]
        %v878 = vld [vmem:[%s7 + $0x8] sm:$0xff]
        %v879 = vld [vmem:[%s7 + $0x10] sm:$0xff]
        %v880 = vld [vmem:[%s8] sm:$0xff]
        %vm881 = vcmask 64512
        %v883 = vsel %vm881, %v874, 0
        %885 = vmatprep.subr.mxu0 0.0
        %886 = vmatpush1.msra.mxu0 %v880
        %887 = vmatprep.subr.mxu0 0.0
        %888 = vmatpush1.msra.mxu0 0.0
        %889 = vmatprep.subr.mxu0 0.0
        %890 = vmatpush1.msra.mxu0 0.0
        %891 = vmatprep.subr.mxu0 0.0
        %892 = vmatpush1.msra.mxu0 0.0
        %893 = vmatprep.subr.mxu0 0.0
        %894 = vmatpush1.msra.mxu0 0.0
        %895 = vmatprep.subr.mxu0 0.0
        %896 = vmatpush1.msra.mxu0 0.0
        %897 = vmatprep.subr.mxu0 0.0
        %898 = vmatpush1.msra.mxu0 0.0
        %899 = vmatprep.subr.mxu0 0.0
        %900 = vmatpush1.msra.mxu0 0.0
        %901 = vmatprep.subr.mxu0 0.0
        %902 = vmatpush1.msra.mxu0 0.0
        %903 = vmatprep.subr.mxu0 0.0
        %904 = vmatpush1.msra.mxu0 0.0
        %905 = vmatprep.subr.mxu0 0.0
        %906 = vmatpush1.msra.mxu0 0.0
        %907 = vmatprep.subr.mxu0 0.0
        %908 = vmatpush1.msra.mxu0 0.0
        %909 = vmatprep.subr.mxu0 0.0
        %910 = vmatpush1.msra.mxu0 0.0
        %911 = vmatprep.subr.mxu0 0.0
        %912 = vmatpush1.msra.mxu0 0.0
        %913 = vmatprep.subr.mxu0 0.0
        %914 = vmatpush1.msra.mxu0 0.0
        %915 = vmatprep.subr.mxu0 0.0
        %916 = vmatpush1.msra.mxu0 0.0
        %917 = vmatprep.subr.mxu0 0.0
        %918 = vmatpush1.msra.mxu0 0.0
        %919 = vmatprep.subr.mxu0 0.0
        %920 = vmatpush1.msra.mxu0 0.0
        %921 = vmatprep.subr.mxu0 0.0
        %922 = vmatpush1.msra.mxu0 0.0
        %923 = vmatprep.subr.mxu0 0.0
        %924 = vmatpush1.msra.mxu0 0.0
        %925 = vmatprep.subr.mxu0 0.0
        %926 = vmatpush1.msra.mxu0 0.0
        %927 = vmatprep.subr.mxu0 0.0
        %928 = vmatpush1.msra.mxu0 0.0
        %929 = vmatprep.subr.mxu0 0.0
        %930 = vmatpush1.msra.mxu0 0.0
        %931 = vmatprep.subr.mxu0 0.0
        %932 = vmatpush1.msra.mxu0 0.0
        %933 = vmatprep.subr.mxu0 0.0
        %934 = vmatpush1.msra.mxu0 0.0
        %935 = vmatprep.subr.mxu0 0.0
        %936 = vmatpush1.msra.mxu0 0.0
        %937 = vmatprep.subr.mxu0 0.0
        %938 = vmatpush1.msra.mxu0 0.0
        %939 = vmatprep.subr.mxu0 0.0
        %940 = vmatpush1.msra.mxu0 0.0
        %941 = vmatprep.subr.mxu0 0.0
        %942 = vmatpush1.msra.mxu0 0.0
        %943 = vmatprep.subr.mxu0 0.0
        %944 = vmatpush1.msra.mxu0 0.0
        %945 = vmatprep.subr.mxu0 0.0
        %946 = vmatpush1.msra.mxu0 0.0
        %947 = vmatprep.subr.mxu0 0.0
        %948 = vmatpush1.msra.mxu0 0.0
        %949 = vmatprep.mubr.f32.mxu0 0.0
        %950 = vmatmul.mubr.f32.gmra.mrb[0].mxu0 %v883
        %v951 = vpop.f32.mrb[0].mxu0
        %v952 = vadd.f32 0.0, %v951
        %v953 = vpop.f32.mrb[0].mxu0
        %954 = vdwg.mxu0
        %vm955 = vcmask 195584
        %v957 = vsel %vm955, %v786, 0
        %959 = vmatprep.subr.mxu0 0.0
        %960 = vmatpush1.msra.mxu0 %v877
        %961 = vmatprep.subr.mxu0 0.0
        %962 = vmatpush1.msra.mxu0 %v878
        %963 = vmatprep.subr.mxu0 0.0
        %964 = vmatpush1.msra.mxu0 %v879
        %965 = vmatprep.subr.mxu0 0.0
        %966 = vmatpush1.msra.mxu0 0.0
        %967 = vmatprep.subr.mxu0 0.0
        %968 = vmatpush1.msra.mxu0 0.0
        %969 = vmatprep.subr.mxu0 0.0
        %970 = vmatpush1.msra.mxu0 0.0
        %971 = vmatprep.subr.mxu0 0.0
        %972 = vmatpush1.msra.mxu0 0.0
        %973 = vmatprep.subr.mxu0 0.0
        %974 = vmatpush1.msra.mxu0 0.0
        %975 = vmatprep.subr.mxu0 0.0
        %976 = vmatpush1.msra.mxu0 0.0
        %977 = vmatprep.subr.mxu0 0.0
        %978 = vmatpush1.msra.mxu0 0.0
        %979 = vmatprep.subr.mxu0 0.0
        %980 = vmatpush1.msra.mxu0 0.0
        %981 = vmatprep.subr.mxu0 0.0
        %982 = vmatpush1.msra.mxu0 0.0
        %983 = vmatprep.subr.mxu0 0.0
        %984 = vmatpush1.msra.mxu0 0.0
        %985 = vmatprep.subr.mxu0 0.0
        %986 = vmatpush1.msra.mxu0 0.0
        %987 = vmatprep.subr.mxu0 0.0
        %988 = vmatpush1.msra.mxu0 0.0
        %989 = vmatprep.subr.mxu0 0.0
        %990 = vmatpush1.msra.mxu0 0.0
        %991 = vmatprep.subr.mxu0 0.0
        %992 = vmatpush1.msra.mxu0 0.0
        %993 = vmatprep.subr.mxu0 0.0
        %994 = vmatpush1.msra.mxu0 0.0
        %995 = vmatprep.subr.mxu0 0.0
        %996 = vmatpush1.msra.mxu0 0.0
        %997 = vmatprep.subr.mxu0 0.0
        %998 = vmatpush1.msra.mxu0 0.0
        %999 = vmatprep.subr.mxu0 0.0
        %1000 = vmatpush1.msra.mxu0 0.0
        %1001 = vmatprep.subr.mxu0 0.0
        %1002 = vmatpush1.msra.mxu0 0.0
        %1003 = vmatprep.subr.mxu0 0.0
        %1004 = vmatpush1.msra.mxu0 0.0
        %1005 = vmatprep.subr.mxu0 0.0
        %1006 = vmatpush1.msra.mxu0 0.0
        %1007 = vmatprep.subr.mxu0 0.0
        %1008 = vmatpush1.msra.mxu0 0.0
        %1009 = vmatprep.subr.mxu0 0.0
        %1010 = vmatpush1.msra.mxu0 0.0
        %1011 = vmatprep.subr.mxu0 0.0
        %1012 = vmatpush1.msra.mxu0 0.0
        %1013 = vmatprep.subr.mxu0 0.0
        %1014 = vmatpush1.msra.mxu0 0.0
        %1015 = vmatprep.subr.mxu0 0.0
        %1016 = vmatpush1.msra.mxu0 0.0
        %1017 = vmatprep.subr.mxu0 0.0
        %1018 = vmatpush1.msra.mxu0 0.0
        %1019 = vmatprep.subr.mxu0 0.0
        %1020 = vmatpush1.msra.mxu0 0.0
        %1021 = vmatprep.subr.mxu0 0.0
        %1022 = vmatpush1.msra.mxu0 0.0
        %1023 = vmatprep.mubr.f32.mxu0 0.0
        %1024 = vmatmul.mubr.f32.gmra.mrb[0].mxu0 %v957
        %v1025 = vpop.f32.mrb[0].mxu0
        %v1026 = vadd.f32 %v952, %v1025
        %v1027 = vpop.f32.mrb[0].mxu0
        %1028 = vdwg.mxu0
        %v1029 = vld [vmem:[%s9] sm:$0x1]
        %v1030 = vadd.f32 %v1026, %v1029
        %1031 = vst [vmem:[%s366] sm:$0x1] %v1030
        %s1032 = sand.u32 %s248, 1
        %s1033 = scalar_lea.sflag [#allocation4], %s1032
        %s1034 = sand.u32 %s248, 1
        %s1035 = scalar_lea.vmem [#allocation5], %s1034
        // Predicated region
        $region65: #{tpu_custom_call.1} parent=59 // pred_check
          %p1036 = pneg %p258
        $region66: #{tpu_custom_call.1} parent=59 // pred_check_branch
          %1038 = sbr.rel (%p1036) target = $region68
        $region67: #{tpu_custom_call.1} parent=59 // pred_region
          %s1040 = ssub.s32 16, 16
          %1041 = vsyncadd %s1033, %s1040
          %s1042 = smul.addr %s25, 16
          %s1043 = scalar_lea.hbm %s10, %s1042
          %s1045 = sshll.u32 %s1035, 4
          %s1046 = int_to_ptr.vmem [resolvable:$true] %s1045
          %1048 = dma.vmem_to_hbm [thread:$0]  %s1046, 16, %s1043, %s1033
        $region68: #{tpu_custom_call.1} parent=59 // pred_fallthru
          _
      $region60: #{tpu_custom_call.1} parent=5 // pred_fallthru
        _
      %p1049 = scmp.le.s32.totalorder 2, %s20
      // Predicated region
      $region69: #{tpu_custom_call.1} parent=5 // pred_check
        %p1050 = pneg %p1049
      $region70: #{tpu_custom_call.1} parent=5 // pred_check_branch
        %1052 = sbr.rel (%p1050) target = $region72
      $region71: #{tpu_custom_call.1} parent=5 // pred_region
        %s1053 = ssub.s32 %s20, 2
        // Predicated region
        $region73: #{tpu_custom_call.1} parent=71 // pred_check
          %p1054 = pneg %p264
        $region74: #{tpu_custom_call.1} parent=71 // pred_check_branch
          %1056 = sbr.rel (%p1054) target = $region76
        $region75: #{tpu_custom_call.1} parent=71 // pred_region
          %s1057 = sand.u32 %s249, 1
          %s1058 = scalar_lea.sflag [#allocation4], %s1057
          %s1059 = sand.u32 %s249, 1
          %s1060 = scalar_lea.vmem [#allocation5], %s1059
          %1061 = dma.done %s1058, 16
        $region76: #{tpu_custom_call.1} parent=71 // pred_fallthru
          _
      $region72: #{tpu_custom_call.1} parent=5 // pred_fallthru
        _
    $region6: #{tpu_custom_call.1} parent=1 // loop_footer
      %s24 = sadd.s32 1, %s20
    $region7: #{tpu_custom_call.1} parent=1 // loop_footer_branch
      %19 = sbr.rel target = $region3
    $region8: #{tpu_custom_call.1} parent=1 // loop_exit
      _
    %1062 = vsyncpa [#allocation3], 1
    %s1063 = scalar_lea.sflag [#allocation3], 1
    %1064 = vsyncpa %s1063, 1
    %1065 = vsyncpa [#allocation4], 1
    %s1066 = scalar_lea.sflag [#allocation4], 1
    %1067 = vsyncpa %s1066, 1

</llo_original>
